<compile_context>
chip_gen: v6e
topology: v6e:2x2x1
jax: 0.10.0
libtpu: 0.0.40
codegen_flags: <defaults>
</compile_context>

<pallas_src>
import functools

import jax
import jax.numpy as jnp
from jax import lax
from jax.experimental import pallas as pl
from jax.experimental.pallas import tpu as pltpu

EPS = 1e-5
MATMUL_DTYPE = jnp.bfloat16   # native MXU rate on v5e/v6e/v7x; f32 accumulation
STORE_DTYPE = jnp.bfloat16    # HBM dtype of the y = conv1x1(...) intermediate
MIN_GRID = 8                  # target grid depth (2 TCs x >= 4 steps on v7x)
VMEM_LIMIT_BYTES = 48 * 1024 * 1024   # stays under v7x's 64 MiB physical VMEM


# ----------------------------- Pallas kernels ------------------------------ #

def _bn_relu_conv1x1_kernel(x_ref, scale_ref, shift_ref, w_ref,
                            y_ref, sum_ref, sq_ref, *, tm, m_total):
    # x_ref: (tm, Cin) f32    scale/shift: (1, Cin) f32    w_ref: (Cin, Cmid) bf16
    # y_ref: (tm, Cmid) bf16  sum_ref/sq_ref: (1, 8, Cmid) f32 BN2 partials.
    i = pl.program_id(0)

    a = jnp.maximum(x_ref[...] * scale_ref[...] + shift_ref[...], 0.0)
    y = jnp.dot(a.astype(MATMUL_DTYPE), w_ref[...],
                preferred_element_type=jnp.float32)
    y_ref[...] = y.astype(y_ref.dtype)

    # BN2 partial statistics, taken from the f32 accumulator before the bf16
    # store.  Rows of a ragged last tile are masked so they do not pollute the
    # batch statistics (their y writes are discarded by Pallas anyway).
    cmid = y.shape[1]
    row = jax.lax.broadcasted_iota(jnp.int32, (tm, 1), 0) + i * tm
    y_m = jnp.where(row < m_total, y, 0.0)
    if tm % 8 == 0:
        # Sublane-aligned partial reduction: (tm, C) -> (tm//8, 8, C) -> (8, C);
        # pure VPU adds, no cross-sublane reduce, no 8x duplicated store.  The
        # remaining 8 rows are summed on the host along with the tile axis.
        ymr = y_m.reshape(tm // 8, 8, cmid)
        sum_ref[0] = jnp.sum(ymr, axis=0)
        sq_ref[0] = jnp.sum(ymr * ymr, axis=0)
    else:  # tiny-m fallback (tm == m < 8)
        sum_ref[0] = jnp.broadcast_to(jnp.sum(y_m, axis=0, keepdims=True), (8, cmid))
        sq_ref[0] = jnp.broadcast_to(jnp.sum(y_m * y_m, axis=0, keepdims=True), (8, cmid))


def _bn_relu_conv3x3_kernel(yc_ref, yu_ref, yd_ref, scale_ref, shift_ref,
                            w_ref, o_ref, *, tr, img_h, img_w):
    # yc_ref: (tr*W, Cmid) bf16 pre-activation rows of this tile.
    # yu_ref/yd_ref: (W, Cmid) bf16 halo row above / below the tile.
    # w_ref: (Cmid, 9*Cout) bf16 fused conv taps, column block t = kh*3 + kw.
    # o_ref: (tr*W, Cout) f32.
    i = pl.program_id(0)
    r0 = i * tr                                   # first image row of the tile
    n_rows = tr * img_w
    cout = o_ref.shape[-1]

    scale = scale_ref[...]
    shift = shift_ref[...]

    def act(t):
        return jnp.maximum(t * scale + shift, 0.0)

    # Halo rows are genuine y rows (clamped index_map); zero them exactly when
    # the tile starts / ends at an image boundary -> exact zero padding of the
    # activated feature map.
    up_ok = ((r0 % img_h) != 0).astype(jnp.float32)
    dn_ok = (((r0 + tr) % img_h) != 0).astype(jnp.float32)
    a_u = (act(yu_ref[...]) * up_ok).astype(MATMUL_DTYPE)      # (W, Cmid)
    a_c = act(yc_ref[...]).astype(MATMUL_DTYPE)                # (tr*W, Cmid)
    a_d = (act(yd_ref[...]) * dn_ok).astype(MATMUL_DTYPE)      # (W, Cmid)
    a_full = jnp.concatenate([a_u, a_c, a_d], axis=0)          # (tr*W + 2W, Cmid)

    # One fused matmul for all 9 taps: MXU N = 9*Cout instead of nine N = Cout
    # launches.
    p_full = jnp.dot(a_full, w_ref[...], preferred_element_type=jnp.float32)

    # Border masks on the *output* pixel column.  Row-scaling / row-permutation
    # commute with the (row-wise) matmul, so masking/rolling the Cout-wide
    # results is bit-identical to masking/rolling the activations — and much
    # cheaper on VPU/XLU and the store path.
    col = jax.lax.broadcasted_iota(jnp.int32, (n_rows, 1), 0) % img_w
    m_left = (col > 0).astype(jnp.float32)             # dw = -1 valid
    m_right = (col < img_w - 1).astype(jnp.float32)    # dw = +1 valid

    acc = jnp.zeros((n_rows, cout), jnp.float32)
    for kh in range(3):                                # dh = kh - 1
        # Sublane-aligned row window (offset multiple of W, W % 8 == 0): for
        # output pixel p, pk[p] is the dh-shifted neighbour row's matmul result.
        pk = p_full[kh * img_w: kh * img_w + n_rows, :]
        t0 = kh * 3
        left = pk[:, (t0 + 0) * cout:(t0 + 1) * cout]
        center = pk[:, (t0 + 1) * cout:(t0 + 2) * cout]
        right = pk[:, (t0 + 2) * cout:(t0 + 3) * cout]
        acc = acc + center
        acc = acc + m_left * pltpu.roll(left, 1, axis=0)              # (., w-1)
        acc = acc + m_right * pltpu.roll(right, n_rows - 1, axis=0)   # (., w+1)

    # TODO(synk): on v5e, if vst/vst.msk saturates (Cout < 128 lanes), transpose
    # acc to (Cout, tr*W) and use a lane-dense out_spec (also lands NCHW).
    o_ref[...] = acc


# ------------------------------ pallas_call wrappers ------------------------ #

def _pick_rows_1x1(m, tm_default=1024, min_grid=MIN_GRID):
    """Rows per 1x1 tile: as large as possible while keeping >= min_grid steps
    (megacore + pipeline depth) whenever the problem size allows it."""
    if m < 8:
        return m
    tm = min(tm_default, m)
    if m // tm < min_grid and m >= 8 * min_grid:
        tm = (m // min_grid) // 8 * 8
    return max(8, (tm // 8) * 8)


def bn_relu_conv1x1_with_stats(x2d, scale1, shift1, w1_mm, *, tm_default=1024):
    """relu(BN1(x)) @ w1 (bf16 MXU, f32 acc, bf16 store), plus per-tile BN2
    sum / sum-of-squares partials taken from the same pass."""
    m, cin = x2d.shape
    cmid = w1_mm.shape[1]
    tm = _pick_rows_1x1(m, tm_default)
    g = pl.cdiv(m, tm)

    kernel = functools.partial(_bn_relu_conv1x1_kernel, tm=tm, m_total=m)
    y2d, psum, psq = pl.pallas_call(
        kernel,
        out_shape=(jax.ShapeDtypeStruct((m, cmid), STORE_DTYPE),
                   jax.ShapeDtypeStruct((g, 8, cmid), jnp.float32),
                   jax.ShapeDtypeStruct((g, 8, cmid), jnp.float32)),
        grid=(g,),
        in_specs=[
            pl.BlockSpec((tm, cin), lambda i: (i, 0)),
            pl.BlockSpec((1, cin), lambda i: (0, 0)),
            pl.BlockSpec((1, cin), lambda i: (0, 0)),
            pl.BlockSpec((cin, cmid), lambda i: (0, 0)),
        ],
        out_specs=(pl.BlockSpec((tm, cmid), lambda i: (i, 0)),
                   pl.BlockSpec((1, 8, cmid), lambda i: (i, 0, 0)),
                   pl.BlockSpec((1, 8, cmid), lambda i: (i, 0, 0))),
        compiler_params=pltpu.CompilerParams(
            dimension_semantics=("parallel",),
            vmem_limit_bytes=VMEM_LIMIT_BYTES),
    )(x2d, scale1, shift1, w1_mm)

    sum_y = jnp.sum(psum, axis=(0, 1))       # (Cmid,)
    sumsq_y = jnp.sum(psq, axis=(0, 1))      # (Cmid,)
    return y2d, sum_y, sumsq_y


def _pick_rows_3x3(img_h, nh, img_w, target_pixels=2048, min_grid=MIN_GRID):
    """Image rows per 3x3 tile: the largest divisor of img_h that (a) fits the
    pixel budget and (b) still leaves >= min_grid grid steps when possible, so
    tiles never straddle images and both TCs stay busy on small shapes."""
    max_rows = max(1, target_pixels // img_w)
    best_fit, best_deep = 1, None
    for d in range(1, img_h + 1):
        if img_h % d == 0 and d <= max_rows:
            best_fit = d
            if nh // d >= min_grid:
                best_deep = d
    return best_deep if best_deep is not None else best_fit


def bn_relu_conv3x3(y2d, scale2, shift2, w_all, *, batch, img_h, img_w,
                    target_pixels=2048):
    """conv3x3(relu(BN2(y))), pad=1, tiled over image rows with 1-row halos."""
    m, cmid = y2d.shape
    cout = w_all.shape[-1] // 9
    nh = batch * img_h
    assert m == nh * img_w
    # TODO(synk): support img_w not a multiple of 8 (halo-row block sublane
    # constraint); DenseNet feature maps used here satisfy it.
    assert img_w % 8 == 0, "img_w must be a multiple of 8"

    tr = _pick_rows_3x3(img_h, nh, img_w, target_pixels)
    nb = nh // tr
    trw = tr * img_w

    kernel = functools.partial(_bn_relu_conv3x3_kernel,
                               tr=tr, img_h=img_h, img_w=img_w)
    return pl.pallas_call(
        kernel,
        out_shape=jax.ShapeDtypeStruct((m, cout), jnp.float32),
        grid=(nb,),
        in_specs=[
            pl.BlockSpec((trw, cmid), lambda i: (i, 0)),                    # tile rows
            pl.BlockSpec((img_w, cmid),
                         lambda i: (jnp.maximum(i * tr - 1, 0), 0)),        # halo above
            pl.BlockSpec((img_w, cmid),
                         lambda i: (jnp.minimum(i * tr + tr, nh - 1), 0)),  # halo below
            pl.BlockSpec((1, cmid), lambda i: (0, 0)),                      # scale2
            pl.BlockSpec((1, cmid), lambda i: (0, 0)),                      # shift2
            pl.BlockSpec((cmid, 9 * cout), lambda i: (0, 0)),               # fused taps
        ],
        out_specs=pl.BlockSpec((trw, cout), lambda i: (i, 0)),
        compiler_params=pltpu.CompilerParams(
            dimension_semantics=("parallel",),
            vmem_limit_bytes=VMEM_LIMIT_BYTES),
    )(y2d, y2d, y2d, scale2, shift2, w_all)


# ------------------------------ forward (glue) ------------------------------ #

def dense_layer_forward(x_nchw, params):
    g1, b1, w1 = params["gamma1"], params["beta1"], params["w1"]
    g2, b2, w2 = params["gamma2"], params["beta2"], params["w2"]
    n, cin, img_h, img_w = x_nchw.shape
    cmid, cout = w1.shape[1], w2.shape[-1]
    m = n * img_h * img_w

    # TODO(synk): in a full dense block, keep NHWC end-to-end and write the new
    # features into a preallocated channel slab (input_output_aliases), and fold
    # the BN1 sum/sumsq below into the producing layer's epilogue, instead of
    # transposing + concatenating + re-reading x at every layer.
    x2d = jnp.transpose(x_nchw, (0, 2, 3, 1)).reshape(m, cin)   # NCHW -> (pixels, C)

    # BN1 (training-mode batch stats, biased variance).  Single-pass sum and
    # sum-of-squares; XLA multi-output-fuses both reductions into one read of x.
    sum1 = jnp.sum(x2d, axis=0)
    sumsq1 = jnp.sum(x2d * x2d, axis=0)
    mean1 = sum1 / m
    var1 = jnp.maximum(sumsq1 / m - mean1 * mean1, 0.0)
    scale1 = g1 * lax.rsqrt(var1 + EPS)
    shift1 = b1 - mean1 * scale1

    # Fused BN1 + ReLU + 1x1 conv; BN2 partial statistics come from the same pass.
    w1_mm = w1.astype(MATMUL_DTYPE)            # pre-cast: no per-step kernel cast
    y2d, sum_y, sumsq_y = bn_relu_conv1x1_with_stats(
        x2d, scale1[None, :], shift1[None, :], w1_mm)

    mean2 = sum_y / m
    var2 = jnp.maximum(sumsq_y / m - mean2 * mean2, 0.0)   # biased variance
    scale2 = g2 * lax.rsqrt(var2 + EPS)
    shift2 = b2 - mean2 * scale2

    # Fuse the nine 3x3 taps along the matmul N dimension: (Cmid, 9*Cout) with
    # column block t = kh*3 + kw holding w2[kh, kw].
    w_all = jnp.transpose(w2, (2, 0, 1, 3)).reshape(cmid, 9 * cout).astype(MATMUL_DTYPE)
    z2d = bn_relu_conv3x3(y2d, scale2[None, :], shift2[None, :], w_all,
                          batch=n, img_h=img_h, img_w=img_w)

    z = jnp.transpose(z2d.reshape(n, img_h, img_w, cout), (0, 3, 1, 2))
    return jnp.concatenate([x_nchw, z], axis=1)


# --------------------------- pure-JAX reference ----------------------------- #

def ref_dense_layer(x, params):
    g1, b1, w1 = params["gamma1"], params["beta1"], params["w1"]
    g2, b2, w2 = params["gamma2"], params["beta2"], params["w2"]

    def bn(t, g, b):
        m = jnp.mean(t, axis=(0, 2, 3), keepdims=True)
        v = jnp.var(t, axis=(0, 2, 3), keepdims=True)
        return (t - m) / jnp.sqrt(v + EPS) * g[None, :, None, None] + b[None, :, None, None]

    h = jax.nn.relu(bn(x, g1, b1))
    w1_oihw = w1.T[:, :, None, None]                     # (Cmid, Cin, 1, 1)
    y = lax.conv_general_dilated(h, w1_oihw, (1, 1), "VALID",
                                 dimension_numbers=("NCHW", "OIHW", "NCHW"))
    h2 = jax.nn.relu(bn(y, g2, b2))
    w2_oihw = jnp.transpose(w2, (3, 2, 0, 1))            # HWIO -> OIHW
    z = lax.conv_general_dilated(h2, w2_oihw, (1, 1), ((1, 1), (1, 1)),
                                 dimension_numbers=("NCHW", "OIHW", "NCHW"))
    return jnp.concatenate([x, z], axis=1)


# ------------------------------- param init --------------------------------- #

def init_params(key, cin, growth_rate, bn_size):
    cmid = bn_size * growth_rate
    cout = growth_rate
    k1, k2, k3, k4, k5, k6 = jax.random.split(key, 6)
    return {
        "gamma1": 0.5 + jax.random.uniform(k1, (cin,), jnp.float32),
        "beta1": 0.1 * jax.random.normal(k2, (cin,), jnp.float32),
        "w1": 0.2 * jax.random.normal(k3, (cin, cmid), jnp.float32),         # 1x1 (I, O)
        "gamma2": 0.5 + jax.random.uniform(k4, (cmid,), jnp.float32),
        "beta2": 0.1 * jax.random.normal(k5, (cmid,), jnp.float32),
        "w2": 0.1 * jax.random.normal(k6, (3, 3, cmid, cout), jnp.float32),  # 3x3 HWIO
    }


if __name__ == "__main__":
    key = jax.random.PRNGKey(0)
    kx, kp = jax.random.split(key)

    N, Cin, H, W = 2, 4, 16, 16
    growth_rate, bn_size = 8, 4

    x = jax.random.normal(kx, (N, Cin, H, W), jnp.float32)
    params = init_params(kp, Cin, growth_rate, bn_size)

    fwd = jax.jit(dense_layer_forward)
    out = jax.block_until_ready(fwd(x, params))
    assert out.shape == (N, Cin + growth_rate, H, W), out.shape

    ref = ref_dense_layer(x, params)
    err = float(jnp.max(jnp.abs(out - ref)))
    # bf16 matmul operands + bf16 storage of the 1x1 intermediate (f32
    # accumulation everywhere) loosen the match vs. the pure-f32 reference.
    assert err < 1e-1, f"max abs error {err}"

    print("KERNEL_OK")
</pallas_src>

<mosaic_0001>
module attributes {stable_mosaic.version = 11 : i64} {
  func.func @_bn_relu_conv1x1_kernel(%arg0: i32, %arg1: memref<64x4xf32, #tpu.memory_space<vmem>>, %arg2: memref<1x4xf32, #tpu.memory_space<vmem>>, %arg3: memref<1x4xf32, #tpu.memory_space<vmem>>, %arg4: memref<4x32xbf16, #tpu.memory_space<vmem>>, %arg5: memref<64x32xbf16, #tpu.memory_space<vmem>>, %arg6: memref<1x8x32xf32, #tpu.memory_space<vmem>>, %arg7: memref<1x8x32xf32, #tpu.memory_space<vmem>>) attributes {dimension_semantics = [#tpu.dimension_semantics<parallel>], iteration_bounds = array<i64: 8>, scalar_prefetch = 0 : i64, scratch_operands = 0 : i64, tpu.core_type = #tpu.core_type<tc>, window_params = [{transform_indices = @transform_0, window_bounds = array<i64: 64, 4>}, {pipeline_mode = #tpu.pipeline_mode<synchronous>, transform_indices = @transform_1, window_bounds = array<i64: 1, 4>}, {pipeline_mode = #tpu.pipeline_mode<synchronous>, transform_indices = @transform_2, window_bounds = array<i64: 1, 4>}, {pipeline_mode = #tpu.pipeline_mode<synchronous>, transform_indices = @transform_3, window_bounds = array<i64: 4, 32>}, {transform_indices = @transform_4, window_bounds = array<i64: 64, 32>}, {transform_indices = @transform_5, window_bounds = array<i64: 1, 8, 32>}, {transform_indices = @transform_6, window_bounds = array<i64: 1, 8, 32>}]} {
    %c0 = arith.constant 0 : index
    %c0_0 = arith.constant 0 : index
    %0 = vector.load %arg1[%c0, %c0_0] : memref<64x4xf32, #tpu.memory_space<vmem>>, vector<64x4xf32>
    %c0_1 = arith.constant 0 : index
    %c0_2 = arith.constant 0 : index
    %1 = vector.load %arg2[%c0_1, %c0_2] : memref<1x4xf32, #tpu.memory_space<vmem>>, vector<1x4xf32>
    %2 = vector.broadcast %1 : vector<1x4xf32> to vector<64x4xf32>
    %3 = arith.mulf %0, %2 : vector<64x4xf32>
    %c0_3 = arith.constant 0 : index
    %c0_4 = arith.constant 0 : index
    %4 = vector.load %arg3[%c0_3, %c0_4] : memref<1x4xf32, #tpu.memory_space<vmem>>, vector<1x4xf32>
    %5 = vector.broadcast %4 : vector<1x4xf32> to vector<64x4xf32>
    %6 = arith.addf %3, %5 : vector<64x4xf32>
    %cst = arith.constant 0.000000e+00 : f32
    %7 = vector.broadcast %cst : f32 to vector<64x4xf32>
    %8 = arith.maximumf %6, %7 : vector<64x4xf32>
    %9 = arith.truncf %8 : vector<64x4xf32> to vector<64x4xbf16>
    %c0_5 = arith.constant 0 : index
    %c0_6 = arith.constant 0 : index
    %10 = vector.load %arg4[%c0_5, %c0_6] : memref<4x32xbf16, #tpu.memory_space<vmem>>, vector<4x32xbf16>
    %cst_7 = arith.constant dense<0.000000e+00> : vector<64x32xf32>
    %11 = tpu.matmul %9, %10, %cst_7 {dimension_numbers = #tpu.dot_dimension_numbers<[1], [0], [0], [1], [0, 0, 1, 1], [], []>} : vector<64x4xbf16>, vector<4x32xbf16>, vector<64x32xf32> -> vector<64x32xf32>
    %12 = arith.truncf %11 : vector<64x32xf32> to vector<64x32xbf16>
    %c0_8 = arith.constant 0 : index
    %c0_9 = arith.constant 0 : index
    %13 = vector.load %arg5[%c0_8, %c0_9] : memref<64x32xbf16, #tpu.memory_space<vmem>>, vector<64x32xbf16>
    tpu.vector_store %arg5[%c0_8, %c0_9], %12 {strides = array<i32>} : memref<64x32xbf16, #tpu.memory_space<vmem>>, vector<64x32xbf16>,
    %14 = tpu.iota {dimensions = array<i32: 0>} : vector<64x1xi32>
    %c64_i32 = arith.constant 64 : i32
    %15 = arith.muli %arg0, %c64_i32 : i32
    %16 = vector.broadcast %15 : i32 to vector<64x1xi32>
    %17 = arith.addi %14, %16 : vector<64x1xi32>
    %c512_i32 = arith.constant 512 : i32
    %18 = vector.broadcast %c512_i32 : i32 to vector<64x1xi32>
    %19 = arith.cmpi slt, %17, %18 : vector<64x1xi32>
    %cst_10 = arith.constant 0.000000e+00 : f32
    %20 = vector.shape_cast %19 : vector<64x1xi1> to vector<64x1xi1>
    %21 = vector.broadcast %20 : vector<64x1xi1> to vector<64x32xi1>
    %22 = vector.broadcast %cst_10 : f32 to vector<64x32xf32>
    %23 = arith.select %21, %11, %22 : vector<64x32xi1>, vector<64x32xf32>
    %24 = vector.shape_cast %23 : vector<64x32xf32> to vector<8x8x32xf32>
    %cst_11 = arith.constant dense<0.000000e+00> : vector<8x32xf32>
    %25 = vector.multi_reduction <add>, %24, %cst_11 [0] : vector<8x8x32xf32> to vector<8x32xf32>
    %c0_12 = arith.constant 0 : index
    %c0_13 = arith.constant 0 : index
    %c0_14 = arith.constant 0 : index
    %26 = vector.load %arg6[%c0_12, %c0_13, %c0_14] : memref<1x8x32xf32, #tpu.memory_space<vmem>>, vector<1x8x32xf32>
    %27 = vector.shape_cast %26 : vector<1x8x32xf32> to vector<8x32xf32>
    %28 = vector.shape_cast %25 : vector<8x32xf32> to vector<1x8x32xf32>
    tpu.vector_store %arg6[%c0_12, %c0_13, %c0_14], %28 {strides = array<i32>} : memref<1x8x32xf32, #tpu.memory_space<vmem>>, vector<1x8x32xf32>,
    %29 = arith.mulf %24, %24 : vector<8x8x32xf32>
    %cst_15 = arith.constant dense<0.000000e+00> : vector<8x32xf32>
    %30 = vector.multi_reduction <add>, %29, %cst_15 [0] : vector<8x8x32xf32> to vector<8x32xf32>
    %c0_16 = arith.constant 0 : index
    %c0_17 = arith.constant 0 : index
    %c0_18 = arith.constant 0 : index
    %31 = vector.load %arg7[%c0_16, %c0_17, %c0_18] : memref<1x8x32xf32, #tpu.memory_space<vmem>>, vector<1x8x32xf32>
    %32 = vector.shape_cast %31 : vector<1x8x32xf32> to vector<8x32xf32>
    %33 = vector.shape_cast %30 : vector<8x32xf32> to vector<1x8x32xf32>
    tpu.vector_store %arg7[%c0_16, %c0_17, %c0_18], %33 {strides = array<i32>} : memref<1x8x32xf32, #tpu.memory_space<vmem>>, vector<1x8x32xf32>,
    return
  }
  func.func @transform_0(%arg0: i32) -> (i32, i32) {
    %c0_i32 = arith.constant 0 : i32
    %c0_i32_0 = arith.constant 0 : i32
    return %arg0, %c0_i32 : i32, i32
  }
  func.func @transform_1(%arg0: i32) -> (i32, i32) {
    %c0_i32 = arith.constant 0 : i32
    %c0_i32_0 = arith.constant 0 : i32
    %c0_i32_1 = arith.constant 0 : i32
    return %c0_i32, %c0_i32_0 : i32, i32
  }
  func.func @transform_2(%arg0: i32) -> (i32, i32) {
    %c0_i32 = arith.constant 0 : i32
    %c0_i32_0 = arith.constant 0 : i32
    %c0_i32_1 = arith.constant 0 : i32
    return %c0_i32, %c0_i32_0 : i32, i32
  }
  func.func @transform_3(%arg0: i32) -> (i32, i32) {
    %c0_i32 = arith.constant 0 : i32
    %c0_i32_0 = arith.constant 0 : i32
    %c0_i32_1 = arith.constant 0 : i32
    return %c0_i32, %c0_i32_0 : i32, i32
  }
  func.func @transform_4(%arg0: i32) -> (i32, i32) {
    %c0_i32 = arith.constant 0 : i32
    %c0_i32_0 = arith.constant 0 : i32
    return %arg0, %c0_i32 : i32, i32
  }
  func.func @transform_5(%arg0: i32) -> (i32, i32, i32) {
    %c0_i32 = arith.constant 0 : i32
    %c0_i32_0 = arith.constant 0 : i32
    %c0_i32_1 = arith.constant 0 : i32
    return %arg0, %c0_i32, %c0_i32_0 : i32, i32, i32
  }
  func.func @transform_6(%arg0: i32) -> (i32, i32, i32) {
    %c0_i32 = arith.constant 0 : i32
    %c0_i32_0 = arith.constant 0 : i32
    %c0_i32_1 = arith.constant 0 : i32
    return %arg0, %c0_i32, %c0_i32_0 : i32, i32, i32
  }
}

module attributes {stable_mosaic.version = 11 : i64} {
  func.func @_bn_relu_conv3x3_kernel(%arg0: i32, %arg1: memref<64x32xbf16, #tpu.memory_space<vmem>>, %arg2: memref<16x32xbf16, #tpu.memory_space<vmem>>, %arg3: memref<16x32xbf16, #tpu.memory_space<vmem>>, %arg4: memref<1x32xf32, #tpu.memory_space<vmem>>, %arg5: memref<1x32xf32, #tpu.memory_space<vmem>>, %arg6: memref<32x72xbf16, #tpu.memory_space<vmem>>, %arg7: memref<64x8xf32, #tpu.memory_space<vmem>>) attributes {dimension_semantics = [#tpu.dimension_semantics<parallel>], iteration_bounds = array<i64: 8>, scalar_prefetch = 0 : i64, scratch_operands = 0 : i64, tpu.core_type = #tpu.core_type<tc>, window_params = [{transform_indices = @transform_0, window_bounds = array<i64: 64, 32>}, {transform_indices = @transform_1, window_bounds = array<i64: 16, 32>}, {transform_indices = @transform_2, window_bounds = array<i64: 16, 32>}, {pipeline_mode = #tpu.pipeline_mode<synchronous>, transform_indices = @transform_3, window_bounds = array<i64: 1, 32>}, {pipeline_mode = #tpu.pipeline_mode<synchronous>, transform_indices = @transform_4, window_bounds = array<i64: 1, 32>}, {pipeline_mode = #tpu.pipeline_mode<synchronous>, transform_indices = @transform_5, window_bounds = array<i64: 32, 72>}, {transform_indices = @transform_6, window_bounds = array<i64: 64, 8>}]} {
    %c4_i32 = arith.constant 4 : i32
    %0 = arith.muli %arg0, %c4_i32 : i32
    %c0 = arith.constant 0 : index
    %c0_0 = arith.constant 0 : index
    %1 = vector.load %arg4[%c0, %c0_0] : memref<1x32xf32, #tpu.memory_space<vmem>>, vector<1x32xf32>
    %c0_1 = arith.constant 0 : index
    %c0_2 = arith.constant 0 : index
    %2 = vector.load %arg5[%c0_1, %c0_2] : memref<1x32xf32, #tpu.memory_space<vmem>>, vector<1x32xf32>
    %c16_i32 = arith.constant 16 : i32
    %c0_i32 = arith.constant 0 : i32
    %3 = arith.cmpi eq, %c16_i32, %c0_i32 : i32
    %c1_i32 = arith.constant 1 : i32
    %4 = arith.select %3, %c1_i32, %c16_i32 : i32
    %5 = arith.remsi %0, %4 : i32
    %c0_i32_3 = arith.constant 0 : i32
    %6 = arith.cmpi ne, %5, %c0_i32_3 : i32
    %c0_i32_4 = arith.constant 0 : i32
    %7 = arith.cmpi slt, %5, %c0_i32_4 : i32
    %c0_i32_5 = arith.constant 0 : i32
    %8 = arith.cmpi slt, %4, %c0_i32_5 : i32
    %9 = arith.xori %7, %8 : i1
    %10 = arith.andi %9, %6 : i1
    %11 = arith.addi %5, %4 : i32
    %12 = arith.select %10, %11, %5 : i32
    %c0_i32_6 = arith.constant 0 : i32
    %13 = arith.cmpi ne, %12, %c0_i32_6 : i32
    %14 = arith.extui %13 : i1 to i32
    %15 = arith.sitofp %14 : i32 to f32
    %c4_i32_7 = arith.constant 4 : i32
    %16 = arith.addi %0, %c4_i32_7 : i32
    %c16_i32_8 = arith.constant 16 : i32
    %c0_i32_9 = arith.constant 0 : i32
    %17 = arith.cmpi eq, %c16_i32_8, %c0_i32_9 : i32
    %c1_i32_10 = arith.constant 1 : i32
    %18 = arith.select %17, %c1_i32_10, %c16_i32_8 : i32
    %19 = arith.remsi %16, %18 : i32
    %c0_i32_11 = arith.constant 0 : i32
    %20 = arith.cmpi ne, %19, %c0_i32_11 : i32
    %c0_i32_12 = arith.constant 0 : i32
    %21 = arith.cmpi slt, %19, %c0_i32_12 : i32
    %c0_i32_13 = arith.constant 0 : i32
    %22 = arith.cmpi slt, %18, %c0_i32_13 : i32
    %23 = arith.xori %21, %22 : i1
    %24 = arith.andi %23, %20 : i1
    %25 = arith.addi %19, %18 : i32
    %26 = arith.select %24, %25, %19 : i32
    %c0_i32_14 = arith.constant 0 : i32
    %27 = arith.cmpi ne, %26, %c0_i32_14 : i32
    %28 = arith.extui %27 : i1 to i32
    %29 = arith.sitofp %28 : i32 to f32
    %c0_15 = arith.constant 0 : index
    %c0_16 = arith.constant 0 : index
    %30 = vector.load %arg2[%c0_15, %c0_16] : memref<16x32xbf16, #tpu.memory_space<vmem>>, vector<16x32xbf16>
    %31 = arith.extf %30 : vector<16x32xbf16> to vector<16x32xf32>
    %32 = vector.broadcast %1 : vector<1x32xf32> to vector<16x32xf32>
    %33 = arith.mulf %31, %32 : vector<16x32xf32>
    %34 = vector.broadcast %2 : vector<1x32xf32> to vector<16x32xf32>
    %35 = arith.addf %33, %34 : vector<16x32xf32>
    %cst = arith.constant 0.000000e+00 : f32
    %36 = vector.broadcast %cst : f32 to vector<16x32xf32>
    %37 = arith.maximumf %35, %36 : vector<16x32xf32>
    %38 = vector.broadcast %15 : f32 to vector<16x32xf32>
    %39 = arith.mulf %37, %38 : vector<16x32xf32>
    %40 = arith.truncf %39 : vector<16x32xf32> to vector<16x32xbf16>
    %c0_17 = arith.constant 0 : index
    %c0_18 = arith.constant 0 : index
    %41 = vector.load %arg1[%c0_17, %c0_18] : memref<64x32xbf16, #tpu.memory_space<vmem>>, vector<64x32xbf16>
    %42 = arith.extf %41 : vector<64x32xbf16> to vector<64x32xf32>
    %43 = vector.broadcast %1 : vector<1x32xf32> to vector<64x32xf32>
    %44 = arith.mulf %42, %43 : vector<64x32xf32>
    %45 = vector.broadcast %2 : vector<1x32xf32> to vector<64x32xf32>
    %46 = arith.addf %44, %45 : vector<64x32xf32>
    %cst_19 = arith.constant 0.000000e+00 : f32
    %47 = vector.broadcast %cst_19 : f32 to vector<64x32xf32>
    %48 = arith.maximumf %46, %47 : vector<64x32xf32>
    %49 = arith.truncf %48 : vector<64x32xf32> to vector<64x32xbf16>
    %c0_20 = arith.constant 0 : index
    %c0_21 = arith.constant 0 : index
    %50 = vector.load %arg3[%c0_20, %c0_21] : memref<16x32xbf16, #tpu.memory_space<vmem>>, vector<16x32xbf16>
    %51 = arith.extf %50 : vector<16x32xbf16> to vector<16x32xf32>
    %52 = vector.broadcast %1 : vector<1x32xf32> to vector<16x32xf32>
    %53 = arith.mulf %51, %52 : vector<16x32xf32>
    %54 = vector.broadcast %2 : vector<1x32xf32> to vector<16x32xf32>
    %55 = arith.addf %53, %54 : vector<16x32xf32>
    %cst_22 = arith.constant 0.000000e+00 : f32
    %56 = vector.broadcast %cst_22 : f32 to vector<16x32xf32>
    %57 = arith.maximumf %55, %56 : vector<16x32xf32>
    %58 = vector.broadcast %29 : f32 to vector<16x32xf32>
    %59 = arith.mulf %57, %58 : vector<16x32xf32>
    %60 = arith.truncf %59 : vector<16x32xf32> to vector<16x32xbf16>
    %61 = tpu.concatenate %40, %49, %60 in 0 : vector<16x32xbf16>, vector<64x32xbf16>, vector<16x32xbf16> -> vector<96x32xbf16>
    %c0_23 = arith.constant 0 : index
    %c0_24 = arith.constant 0 : index
    %62 = vector.load %arg6[%c0_23, %c0_24] : memref<32x72xbf16, #tpu.memory_space<vmem>>, vector<32x72xbf16>
    %cst_25 = arith.constant dense<0.000000e+00> : vector<96x72xf32>
    %63 = tpu.matmul %61, %62, %cst_25 {dimension_numbers = #tpu.dot_dimension_numbers<[1], [0], [0], [1], [0, 0, 1, 1], [], []>} : vector<96x32xbf16>, vector<32x72xbf16>, vector<96x72xf32> -> vector<96x72xf32>
    %64 = tpu.iota {dimensions = array<i32: 0>} : vector<64x1xi32>
    %c16_i32_26 = arith.constant 16 : i32
    %c0_i32_27 = arith.constant 0 : i32
    %65 = arith.cmpi eq, %c16_i32_26, %c0_i32_27 : i32
    %c1_i32_28 = arith.constant 1 : i32
    %66 = arith.select %65, %c1_i32_28, %c16_i32_26 : i32
    %67 = vector.broadcast %66 : i32 to vector<64x1xi32>
    %68 = arith.remsi %64, %67 : vector<64x1xi32>
    %c0_i32_29 = arith.constant 0 : i32
    %69 = vector.broadcast %c0_i32_29 : i32 to vector<64x1xi32>
    %70 = arith.cmpi ne, %68, %69 : vector<64x1xi32>
    %c0_i32_30 = arith.constant 0 : i32
    %71 = vector.broadcast %c0_i32_30 : i32 to vector<64x1xi32>
    %72 = arith.cmpi slt, %68, %71 : vector<64x1xi32>
    %c0_i32_31 = arith.constant 0 : i32
    %73 = arith.cmpi slt, %66, %c0_i32_31 : i32
    %74 = vector.broadcast %73 : i1 to vector<64x1xi1>
    %75 = vector.broadcast %74 : vector<64x1xi1> to vector<64x1xi1>
    %76 = arith.xori %72, %75 : vector<64x1xi1>
    %77 = arith.andi %76, %70 : vector<64x1xi1>
    %78 = vector.broadcast %66 : i32 to vector<64x1xi32>
    %79 = arith.addi %68, %78 : vector<64x1xi32>
    %80 = arith.select %77, %79, %68 : vector<64x1xi1>, vector<64x1xi32>
    %c0_i32_32 = arith.constant 0 : i32
    %81 = vector.broadcast %c0_i32_32 : i32 to vector<64x1xi32>
    %82 = arith.cmpi sgt, %80, %81 : vector<64x1xi32>
    %83 = arith.extui %82 : vector<64x1xi1> to vector<64x1xi32>
    %84 = arith.sitofp %83 : vector<64x1xi32> to vector<64x1xf32>
    %c15_i32 = arith.constant 15 : i32
    %85 = vector.broadcast %c15_i32 : i32 to vector<64x1xi32>
    %86 = arith.cmpi slt, %80, %85 : vector<64x1xi32>
    %87 = arith.extui %86 : vector<64x1xi1> to vector<64x1xi32>
    %88 = arith.sitofp %87 : vector<64x1xi32> to vector<64x1xf32>
    %cst_33 = arith.constant 0.000000e+00 : f32
    %89 = vector.broadcast %cst_33 : f32 to vector<64x8xf32>
    %90 = vector.extract_strided_slice %63 {offsets = [0, 0], sizes = [64, 72], strides = [1, 1]} : vector<96x72xf32> to vector<64x72xf32>
    %91 = vector.extract_strided_slice %90 {offsets = [0, 0], sizes = [64, 8], strides = [1, 1]} : vector<64x72xf32> to vector<64x8xf32>
    %92 = vector.extract_strided_slice %90 {offsets = [0, 8], sizes = [64, 8], strides = [1, 1]} : vector<64x72xf32> to vector<64x8xf32>
    %93 = vector.extract_strided_slice %90 {offsets = [0, 16], sizes = [64, 8], strides = [1, 1]} : vector<64x72xf32> to vector<64x8xf32>
    %94 = arith.addf %89, %92 : vector<64x8xf32>
    %c1_i32_34 = arith.constant 1 : i32
    %95 = tpu.dynamic_rotate %91 by %c1_i32_34 dim 0 : vector<64x8xf32>, i32 -> vector<64x8xf32>
    %96 = vector.broadcast %84 : vector<64x1xf32> to vector<64x8xf32>
    %97 = arith.mulf %96, %95 : vector<64x8xf32>
    %98 = arith.addf %94, %97 : vector<64x8xf32>
    %c63_i32 = arith.constant 63 : i32
    %99 = tpu.dynamic_rotate %93 by %c63_i32 dim 0 : vector<64x8xf32>, i32 -> vector<64x8xf32>
    %100 = vector.broadcast %88 : vector<64x1xf32> to vector<64x8xf32>
    %101 = arith.mulf %100, %99 : vector<64x8xf32>
    %102 = arith.addf %98, %101 : vector<64x8xf32>
    %103 = vector.extract_strided_slice %63 {offsets = [16, 0], sizes = [64, 72], strides = [1, 1]} : vector<96x72xf32> to vector<64x72xf32>
    %104 = vector.extract_strided_slice %103 {offsets = [0, 24], sizes = [64, 8], strides = [1, 1]} : vector<64x72xf32> to vector<64x8xf32>
    %105 = vector.extract_strided_slice %103 {offsets = [0, 32], sizes = [64, 8], strides = [1, 1]} : vector<64x72xf32> to vector<64x8xf32>
    %106 = vector.extract_strided_slice %103 {offsets = [0, 40], sizes = [64, 8], strides = [1, 1]} : vector<64x72xf32> to vector<64x8xf32>
    %107 = arith.addf %102, %105 : vector<64x8xf32>
    %c1_i32_35 = arith.constant 1 : i32
    %108 = tpu.dynamic_rotate %104 by %c1_i32_35 dim 0 : vector<64x8xf32>, i32 -> vector<64x8xf32>
    %109 = vector.broadcast %84 : vector<64x1xf32> to vector<64x8xf32>
    %110 = arith.mulf %109, %108 : vector<64x8xf32>
    %111 = arith.addf %107, %110 : vector<64x8xf32>
    %c63_i32_36 = arith.constant 63 : i32
    %112 = tpu.dynamic_rotate %106 by %c63_i32_36 dim 0 : vector<64x8xf32>, i32 -> vector<64x8xf32>
    %113 = vector.broadcast %88 : vector<64x1xf32> to vector<64x8xf32>
    %114 = arith.mulf %113, %112 : vector<64x8xf32>
    %115 = arith.addf %111, %114 : vector<64x8xf32>
    %116 = vector.extract_strided_slice %63 {offsets = [32, 0], sizes = [64, 72], strides = [1, 1]} : vector<96x72xf32> to vector<64x72xf32>
    %117 = vector.extract_strided_slice %116 {offsets = [0, 48], sizes = [64, 8], strides = [1, 1]} : vector<64x72xf32> to vector<64x8xf32>
    %118 = vector.extract_strided_slice %116 {offsets = [0, 56], sizes = [64, 8], strides = [1, 1]} : vector<64x72xf32> to vector<64x8xf32>
    %119 = vector.extract_strided_slice %116 {offsets = [0, 64], sizes = [64, 8], strides = [1, 1]} : vector<64x72xf32> to vector<64x8xf32>
    %120 = arith.addf %115, %118 : vector<64x8xf32>
    %c1_i32_37 = arith.constant 1 : i32
    %121 = tpu.dynamic_rotate %117 by %c1_i32_37 dim 0 : vector<64x8xf32>, i32 -> vector<64x8xf32>
    %122 = vector.broadcast %84 : vector<64x1xf32> to vector<64x8xf32>
    %123 = arith.mulf %122, %121 : vector<64x8xf32>
    %124 = arith.addf %120, %123 : vector<64x8xf32>
    %c63_i32_38 = arith.constant 63 : i32
    %125 = tpu.dynamic_rotate %119 by %c63_i32_38 dim 0 : vector<64x8xf32>, i32 -> vector<64x8xf32>
    %126 = vector.broadcast %88 : vector<64x1xf32> to vector<64x8xf32>
    %127 = arith.mulf %126, %125 : vector<64x8xf32>
    %128 = arith.addf %124, %127 : vector<64x8xf32>
    %c0_39 = arith.constant 0 : index
    %c0_40 = arith.constant 0 : index
    %129 = vector.load %arg7[%c0_39, %c0_40] : memref<64x8xf32, #tpu.memory_space<vmem>>, vector<64x8xf32>
    tpu.vector_store %arg7[%c0_39, %c0_40], %128 {strides = array<i32>} : memref<64x8xf32, #tpu.memory_space<vmem>>, vector<64x8xf32>,
    return
  }
  func.func @transform_0(%arg0: i32) -> (i32, i32) {
    %c0_i32 = arith.constant 0 : i32
    %c0_i32_0 = arith.constant 0 : i32
    return %arg0, %c0_i32 : i32, i32
  }
  func.func @transform_1(%arg0: i32) -> (i32, i32) {
    %c4_i32 = arith.constant 4 : i32
    %0 = arith.muli %arg0, %c4_i32 : i32
    %c1_i32 = arith.constant 1 : i32
    %1 = arith.subi %0, %c1_i32 : i32
    %c0_i32 = arith.constant 0 : i32
    %2 = arith.maxsi %1, %c0_i32 : i32
    %c0_i32_0 = arith.constant 0 : i32
    %c0_i32_1 = arith.constant 0 : i32
    return %2, %c0_i32_0 : i32, i32
  }
  func.func @transform_2(%arg0: i32) -> (i32, i32) {
    %c4_i32 = arith.constant 4 : i32
    %0 = arith.muli %arg0, %c4_i32 : i32
    %c4_i32_0 = arith.constant 4 : i32
    %1 = arith.addi %0, %c4_i32_0 : i32
    %c31_i32 = arith.constant 31 : i32
    %2 = arith.minsi %1, %c31_i32 : i32
    %c0_i32 = arith.constant 0 : i32
    %c0_i32_1 = arith.constant 0 : i32
    return %2, %c0_i32 : i32, i32
  }
  func.func @transform_3(%arg0: i32) -> (i32, i32) {
    %c0_i32 = arith.constant 0 : i32
    %c0_i32_0 = arith.constant 0 : i32
    %c0_i32_1 = arith.constant 0 : i32
    return %c0_i32, %c0_i32_0 : i32, i32
  }
  func.func @transform_4(%arg0: i32) -> (i32, i32) {
    %c0_i32 = arith.constant 0 : i32
    %c0_i32_0 = arith.constant 0 : i32
    %c0_i32_1 = arith.constant 0 : i32
    return %c0_i32, %c0_i32_0 : i32, i32
  }
  func.func @transform_5(%arg0: i32) -> (i32, i32) {
    %c0_i32 = arith.constant 0 : i32
    %c0_i32_0 = arith.constant 0 : i32
    %c0_i32_1 = arith.constant 0 : i32
    return %c0_i32, %c0_i32_0 : i32, i32
  }
  func.func @transform_6(%arg0: i32) -> (i32, i32) {
    %c0_i32 = arith.constant 0 : i32
    %c0_i32_0 = arith.constant 0 : i32
    return %arg0, %c0_i32 : i32, i32
  }
}

</mosaic_0001>

<llo_original>
// kernel: dense_layer_forward.2
$region0: #{dense_layer_forward.2}
  #allocation0 [shape = 'u32[]', space=smem, size = 0x4, offset = 0x4, fixed_abs, tag = 'smem constant byte address 0x4 - core index']
  #allocation1 [shape = 'u32[144,128]{1,0:T(1,128)}', space=vmem, size = 0x12000, scoped, tag = 'internal scratch']
  %s0 = inlined_call_operand.vmem [shape: f32[512,4], index: 0, kind: input, shape index: {}]
  %s1 = inlined_call_operand.vmem [shape: f32[1,4], index: 1, kind: input, shape index: {}]
  %s2 = inlined_call_operand.vmem [shape: f32[1,4], index: 2, kind: input, shape index: {}]
  %s3 = inlined_call_operand.vmem [shape: bf16[4,32], index: 3, kind: input, shape index: {}]
  %s4 = inlined_call_operand.vmem [shape: bf16[512,32], index: 4, kind: output, shape index: {0}]
  %s5 = inlined_call_operand.vmem [shape: f32[8,8,32], index: 5, kind: output, shape index: {1}]
  %s6 = inlined_call_operand.vmem [shape: f32[8,8,32], index: 6, kind: output, shape index: {2}]
  %7 = xla_tuple %s4, %s5, %s6
  %s8 = sld [smem:[#allocation0]]
  $region65: #{dense_layer_forward.2} parent=0
    _
  %s10 = ssub.s32 1, %s8
  %s11 = scalar_select 0, %s10, %s8
  loop: start=0, step=1, limit=10
  $region2: #{dense_layer_forward.2} parent=0 // loop_pre_header
    _
  $region3: #{dense_layer_forward.2} parent=0 // loop_header
    %s13 = sphi 0, %s17
    %p14 = scmp.ge.s32.totalorder %s13, 10
    %s23 = sphi 0, %s25
    %s26 = sphi 0, %s23
    %s27 = sphi 0, %s26
    %s43 = sphi 0, %s27
    %s47 = sphi 0, %s47
    %s49 = sphi 0, %s47
    %s50 = sphi 0, %s49
    %s64 = sphi 0, %s50
    %s68 = sphi 0, %s68
    %s70 = sphi 0, %s68
    %s71 = sphi 0, %s70
    %s85 = sphi 0, %s71
    %s89 = sphi 0, %s89
    %s91 = sphi 0, %s89
    %s92 = sphi 0, %s91
    %s106 = sphi 0, %s92
    %s112 = sphi 0, %s114
    %s115 = sphi 0, %s112
    %s116 = sphi 0, %s115
    %s132 = sphi 0, %s116
    %s138 = sphi 0, %s140
    %s141 = sphi 0, %s138
    %s142 = sphi 0, %s141
    %s158 = sphi 0, %s142
    %s164 = sphi 0, %s166
    %s167 = sphi 0, %s164
    %s168 = sphi 0, %s167
    %s184 = sphi 0, %s168
  $region4: #{dense_layer_forward.2} parent=0 // loop_header_branch
    %16 = sbr.rel (%p14) target = $region8
  $region5: #{dense_layer_forward.2} parent=0 // loop_body
    %s18 = ssub.s32 %s13, 1
    %s19 = ssub.s32 %s13, 2
    %s20 = sadd.s32 %s13, 1
    %s21 = ssub.s32 %s13, %s20
    %p22 = scmp.eq.s32.totalorder %s21, 0
    %s24 = sadd.s32 %s23, 1
    %s25 = scalar_select %p22, %s23, %s24
    %p28 = pneg %p22
    %p29 = scmp.eq.s32.totalorder %s13, 7
    %p30 = por %p28, %p29
    %p31 = scmp.ne.s32.totalorder %s23, %s26
    %p32 = scmp.eq.s32.totalorder %s13, 0
    %p33 = por %p31, %p32
    %p34 = scmp.ne.s32.totalorder %s23, %s26
    %p35 = scmp.eq.s32.totalorder %s18, 7
    %p36 = por %p34, %p35
    %p37 = scmp.ne.s32.totalorder %s26, %s27
    %p38 = scmp.eq.s32.totalorder %s18, 0
    %p39 = por %p37, %p38
    %p40 = scmp.ne.s32.totalorder %s26, %s27
    %p41 = scmp.eq.s32.totalorder %s19, 7
    %p42 = por %p40, %p41
    %p44 = scmp.ne.s32.totalorder %s27, %s43
    %p45 = scmp.eq.s32.totalorder %s19, 0
    %p46 = por %p44, %p45
    %s48 = sadd.s32 %s47, 1
    %p51 = scmp.eq.s32.totalorder %s13, 7
    %p52 = scmp.ne.s32.totalorder %s47, %s49
    %p53 = scmp.eq.s32.totalorder %s13, 0
    %p54 = por %p52, %p53
    %p55 = scmp.ne.s32.totalorder %s47, %s49
    %p56 = scmp.eq.s32.totalorder %s18, 7
    %p57 = por %p55, %p56
    %p58 = scmp.ne.s32.totalorder %s49, %s50
    %p59 = scmp.eq.s32.totalorder %s18, 0
    %p60 = por %p58, %p59
    %p61 = scmp.ne.s32.totalorder %s49, %s50
    %p62 = scmp.eq.s32.totalorder %s19, 7
    %p63 = por %p61, %p62
    %p65 = scmp.ne.s32.totalorder %s50, %s64
    %p66 = scmp.eq.s32.totalorder %s19, 0
    %p67 = por %p65, %p66
    %s69 = sadd.s32 %s68, 1
    %p72 = scmp.eq.s32.totalorder %s13, 7
    %p73 = scmp.ne.s32.totalorder %s68, %s70
    %p74 = scmp.eq.s32.totalorder %s13, 0
    %p75 = por %p73, %p74
    %p76 = scmp.ne.s32.totalorder %s68, %s70
    %p77 = scmp.eq.s32.totalorder %s18, 7
    %p78 = por %p76, %p77
    %p79 = scmp.ne.s32.totalorder %s70, %s71
    %p80 = scmp.eq.s32.totalorder %s18, 0
    %p81 = por %p79, %p80
    %p82 = scmp.ne.s32.totalorder %s70, %s71
    %p83 = scmp.eq.s32.totalorder %s19, 7
    %p84 = por %p82, %p83
    %p86 = scmp.ne.s32.totalorder %s71, %s85
    %p87 = scmp.eq.s32.totalorder %s19, 0
    %p88 = por %p86, %p87
    %s90 = sadd.s32 %s89, 1
    %p93 = scmp.eq.s32.totalorder %s13, 7
    %p94 = scmp.ne.s32.totalorder %s89, %s91
    %p95 = scmp.eq.s32.totalorder %s13, 0
    %p96 = por %p94, %p95
    %p97 = scmp.ne.s32.totalorder %s89, %s91
    %p98 = scmp.eq.s32.totalorder %s18, 7
    %p99 = por %p97, %p98
    %p100 = scmp.ne.s32.totalorder %s91, %s92
    %p101 = scmp.eq.s32.totalorder %s18, 0
    %p102 = por %p100, %p101
    %p103 = scmp.ne.s32.totalorder %s91, %s92
    %p104 = scmp.eq.s32.totalorder %s19, 7
    %p105 = por %p103, %p104
    %p107 = scmp.ne.s32.totalorder %s92, %s106
    %p108 = scmp.eq.s32.totalorder %s19, 0
    %p109 = por %p107, %p108
    %s110 = ssub.s32 %s13, %s20
    %p111 = scmp.eq.s32.totalorder %s110, 0
    %s113 = sadd.s32 %s112, 1
    %s114 = scalar_select %p111, %s112, %s113
    %p117 = pneg %p111
    %p118 = scmp.eq.s32.totalorder %s13, 7
    %p119 = por %p117, %p118
    %p120 = scmp.ne.s32.totalorder %s112, %s115
    %p121 = scmp.eq.s32.totalorder %s13, 0
    %p122 = por %p120, %p121
    %p123 = scmp.ne.s32.totalorder %s112, %s115
    %p124 = scmp.eq.s32.totalorder %s18, 7
    %p125 = por %p123, %p124
    %p126 = scmp.ne.s32.totalorder %s115, %s116
    %p127 = scmp.eq.s32.totalorder %s18, 0
    %p128 = por %p126, %p127
    %p129 = scmp.ne.s32.totalorder %s115, %s116
    %p130 = scmp.eq.s32.totalorder %s19, 7
    %p131 = por %p129, %p130
    %p133 = scmp.ne.s32.totalorder %s116, %s132
    %p134 = scmp.eq.s32.totalorder %s19, 0
    %p135 = por %p133, %p134
    %s136 = ssub.s32 %s13, %s20
    %p137 = scmp.eq.s32.totalorder %s136, 0
    %s139 = sadd.s32 %s138, 1
    %s140 = scalar_select %p137, %s138, %s139
    %p143 = pneg %p137
    %p144 = scmp.eq.s32.totalorder %s13, 7
    %p145 = por %p143, %p144
    %p146 = scmp.ne.s32.totalorder %s138, %s141
    %p147 = scmp.eq.s32.totalorder %s13, 0
    %p148 = por %p146, %p147
    %p149 = scmp.ne.s32.totalorder %s138, %s141
    %p150 = scmp.eq.s32.totalorder %s18, 7
    %p151 = por %p149, %p150
    %p152 = scmp.ne.s32.totalorder %s141, %s142
    %p153 = scmp.eq.s32.totalorder %s18, 0
    %p154 = por %p152, %p153
    %p155 = scmp.ne.s32.totalorder %s141, %s142
    %p156 = scmp.eq.s32.totalorder %s19, 7
    %p157 = por %p155, %p156
    %p159 = scmp.ne.s32.totalorder %s142, %s158
    %p160 = scmp.eq.s32.totalorder %s19, 0
    %p161 = por %p159, %p160
    %s162 = ssub.s32 %s13, %s20
    %p163 = scmp.eq.s32.totalorder %s162, 0
    %s165 = sadd.s32 %s164, 1
    %s166 = scalar_select %p163, %s164, %s165
    %p169 = pneg %p163
    %p170 = scmp.eq.s32.totalorder %s13, 7
    %p171 = por %p169, %p170
    %p172 = scmp.ne.s32.totalorder %s164, %s167
    %p173 = scmp.eq.s32.totalorder %s13, 0
    %p174 = por %p172, %p173
    %p175 = scmp.ne.s32.totalorder %s164, %s167
    %p176 = scmp.eq.s32.totalorder %s18, 7
    %p177 = por %p175, %p176
    %p178 = scmp.ne.s32.totalorder %s167, %s168
    %p179 = scmp.eq.s32.totalorder %s18, 0
    %p180 = por %p178, %p179
    %p181 = scmp.ne.s32.totalorder %s167, %s168
    %p182 = scmp.eq.s32.totalorder %s19, 7
    %p183 = por %p181, %p182
    %p185 = scmp.ne.s32.totalorder %s168, %s184
    %p186 = scmp.eq.s32.totalorder %s19, 0
    %p187 = por %p185, %p186
    %p188 = scmp.le.s32.totalorder 1, %s13
    %p189 = scmp.lt.s32.totalorder %s13, 9
    %p190 = pnand %p188, %p189
    %p191 = pneg %p190
    // Predicated region
    $region9: #{dense_layer_forward.2} parent=5 // pred_check
      _
    $region10: #{dense_layer_forward.2} parent=5 // pred_check_branch
      %193 = sbr.rel (%p190) target = $region12
    $region11: #{dense_layer_forward.2} parent=5 // pred_region
      %s194 = ssub.s32 %s13, 1
      // Predicated region
      $region13: #{dense_layer_forward.2} parent=11 // pred_check
        %p195 = pneg %p60
      $region14: #{dense_layer_forward.2} parent=11 // pred_check_branch
        %197 = sbr.rel (%p195) target = $region16
      $region15: #{dense_layer_forward.2} parent=11 // pred_region
        _
      $region16: #{dense_layer_forward.2} parent=11 // pred_fallthru
        _
      // Predicated region
      $region17: #{dense_layer_forward.2} parent=11 // pred_check
        %p198 = pneg %p81
      $region18: #{dense_layer_forward.2} parent=11 // pred_check_branch
        %200 = sbr.rel (%p198) target = $region20
      $region19: #{dense_layer_forward.2} parent=11 // pred_region
        _
      $region20: #{dense_layer_forward.2} parent=11 // pred_fallthru
        _
      // Predicated region
      $region21: #{dense_layer_forward.2} parent=11 // pred_check
        %p201 = pneg %p102
      $region22: #{dense_layer_forward.2} parent=11 // pred_check_branch
        %203 = sbr.rel (%p201) target = $region24
      $region23: #{dense_layer_forward.2} parent=11 // pred_region
        _
      $region24: #{dense_layer_forward.2} parent=11 // pred_fallthru
        _
    $region12: #{dense_layer_forward.2} parent=5 // pred_fallthru
      _
    %p204 = scmp.lt.s32.totalorder %s13, 8
    // Predicated region
    $region25: #{dense_layer_forward.2} parent=5 // pred_check
      %p205 = pneg %p204
    $region26: #{dense_layer_forward.2} parent=5 // pred_check_branch
      %207 = sbr.rel (%p205) target = $region28
    $region27: #{dense_layer_forward.2} parent=5 // pred_region
      // Predicated region
      $region29: #{dense_layer_forward.2} parent=27 // pred_check
        %p208 = pneg %p33
      $region30: #{dense_layer_forward.2} parent=27 // pred_check_branch
        %210 = sbr.rel (%p208) target = $region32
      $region31: #{dense_layer_forward.2} parent=27 // pred_region
        %s211 = smul.u32 8, %s13
        %p212 = scmp.lt.s32.totalorder %s211, 63
        %s213 = scalar_select %p212, %s211, 63
        %s214 = smul.addr %s213, 8
        %s215 = scalar_lea.vmem %s0, %s214
        %s216 = smul.u32 8, %s13
      $region32: #{dense_layer_forward.2} parent=27 // pred_fallthru
        _
    $region28: #{dense_layer_forward.2} parent=5 // pred_fallthru
      _
    %p217 = scmp.le.s32.totalorder 1, %s13
    %p218 = scmp.lt.s32.totalorder %s13, 9
    %p219 = pnand %p217, %p218
    %p220 = pneg %p219
    // Predicated region
    $region33: #{dense_layer_forward.2} parent=5 // pred_check
      _
    $region34: #{dense_layer_forward.2} parent=5 // pred_check_branch
      %222 = sbr.rel (%p219) target = $region36
    $region35: #{dense_layer_forward.2} parent=5 // pred_region
      %s223 = ssub.s32 %s13, 1
      %s224 = smul.u32 8, %s18
      %p225 = scmp.lt.s32.totalorder %s224, 63
      %s226 = scalar_select %p225, %s224, 63
      %s227 = smul.addr %s226, 8
      %s228 = scalar_lea.vmem %s0, %s227
      %p229 = pneg %p39
      %p230 = pneg %p36
      %p231 = pneg %p60
      %p232 = pneg %p57
      %p233 = pneg %p81
      %p234 = pneg %p78
      %p235 = pneg %p102
      %p236 = pneg %p99
      %p237 = pneg %p128
      %p238 = pneg %p125
      %s239 = smul.u32 8, %s18
      %p240 = scmp.lt.s32.totalorder %s239, 63
      %s241 = scalar_select %p240, %s239, 63
      %s242 = smul.addr %s241, 4
      %s243 = scalar_lea.vmem %s4, %s242
      %p244 = pneg %p154
      %p245 = pneg %p151
      %p246 = scmp.lt.s32.totalorder %s18, 7
      %s247 = scalar_select %p246, %s18, 7
      %s248 = smul.addr %s247, 8
      %s249 = scalar_lea.vmem %s5, %s248
      %p250 = pneg %p180
      %p251 = pneg %p177
      %p252 = scmp.lt.s32.totalorder %s18, 7
      %s253 = scalar_select %p252, %s18, 7
      %s254 = smul.addr %s253, 8
      %s255 = scalar_lea.vmem %s6, %s254
      %s256 = smul.u32 8, %s18
      %p257 = scmp.lt.s32.totalorder %s256, 63
      %s258 = scalar_select %p257, %s256, 63
      %s259 = smul.addr %s258, 8
      %s260 = scalar_lea.vmem %s0, %s259
      %s261 = smul.u32 8, %s18
      %s262 = smul.u32 8, %s18
      %p263 = scmp.lt.s32.totalorder %s262, 63
      %s264 = scalar_select %p263, %s262, 63
      %s265 = smul.addr %s264, 4
      %s266 = scalar_lea.vmem %s4, %s265
      %s267 = smul.u32 8, %s18
      %p268 = scmp.lt.s32.totalorder %s18, 7
      %s269 = scalar_select %p268, %s18, 7
      %s270 = smul.addr %s269, 8
      %s271 = scalar_lea.vmem %s5, %s270
      %p272 = scmp.lt.s32.totalorder %s18, 7
      %s273 = scalar_select %p272, %s18, 7
      %s274 = smul.addr %s273, 8
      %s275 = scalar_lea.vmem %s6, %s274
      %v277 = vld [vmem:[%s260] sm:$0xff]
      %v278 = vld [vmem:[%s260 + $0x8] sm:$0xff]
      %v279 = vld [vmem:[%s260 + $0x10] sm:$0xff]
      %v280 = vld [vmem:[%s260 + $0x18] sm:$0xff]
      %v281 = vld [vmem:[%s260 + $0x20] sm:$0xff]
      %v282 = vld [vmem:[%s260 + $0x28] sm:$0xff]
      %v283 = vld [vmem:[%s260 + $0x30] sm:$0xff]
      %v284 = vld [vmem:[%s260 + $0x38] sm:$0xff]
      %v285 = vld [vmem:[%s1] sm:$0x1]
      %v287 = vlaneseq
      %v288 = vshrl.u32 %v287, 7
      %v289 = vsub.s32 0, %v288
      %v290 = vrot.slane %v285, %v289
      %v292 = vmul.f32 %v277, %v290
      %v293 = vmul.f32 %v278, %v290
      %v294 = vmul.f32 %v279, %v290
      %v295 = vmul.f32 %v280, %v290
      %v296 = vmul.f32 %v281, %v290
      %v297 = vmul.f32 %v282, %v290
      %v298 = vmul.f32 %v283, %v290
      %v299 = vmul.f32 %v284, %v290
      %v300 = vld [vmem:[%s2] sm:$0x1]
      %v302 = vlaneseq
      %v303 = vshrl.u32 %v302, 7
      %v304 = vsub.s32 0, %v303
      %v305 = vrot.slane %v300, %v304
      %v307 = vadd.f32 %v292, %v305
      %v308 = vadd.f32 %v293, %v305
      %v309 = vadd.f32 %v294, %v305
      %v310 = vadd.f32 %v295, %v305
      %v311 = vadd.f32 %v296, %v305
      %v312 = vadd.f32 %v297, %v305
      %v313 = vadd.f32 %v298, %v305
      %v314 = vadd.f32 %v299, %v305
      %v315 = vmax.f32 %v307, 0.0
      %v316 = vmax.f32 %v308, 0.0
      %v317 = vmax.f32 %v309, 0.0
      %v318 = vmax.f32 %v310, 0.0
      %v319 = vmax.f32 %v311, 0.0
      %v320 = vmax.f32 %v312, 0.0
      %v321 = vmax.f32 %v313, 0.0
      %v322 = vmax.f32 %v314, 0.0
      %v323 = vpack.c.bf16 %v316, %v315
      %v324 = vpack.c.bf16 %v318, %v317
      %v325 = vpack.c.bf16 %v320, %v319
      %v326 = vpack.c.bf16 %v322, %v321
      %v327 = vld [vmem:[%s3] sm:$0x3]
      %vm328 = vcmask 31744
      %v330 = vsel %vm328, %v323, 0
      %v333 = vsel %vm328, %v324, 0
      %v336 = vsel %vm328, %v325, 0
      %v339 = vsel %vm328, %v326, 0
      %vm341 = vcmask 1041408
      %v343 = vsel %vm341, %v327, 0
      %345 = vmatprep.subr.bf16.mxu0 0
      %346 = vmatpush1.bf16.msra.mxu0 0
      %347 = vmatprep.subr.bf16.mxu0 0
      %348 = vmatpush1.bf16.msra.mxu0 0
      %349 = vmatprep.subr.bf16.mxu0 0
      %350 = vmatpush1.bf16.msra.mxu0 0
      %351 = vmatprep.subr.bf16.mxu0 0
      %352 = vmatpush1.bf16.msra.mxu0 0
      %353 = vmatprep.subr.bf16.mxu0 0
      %354 = vmatpush1.bf16.msra.mxu0 0
      %355 = vmatprep.subr.bf16.mxu0 0
      %356 = vmatpush1.bf16.msra.mxu0 0
      %357 = vmatprep.subr.bf16.mxu0 0
      %358 = vmatpush1.bf16.msra.mxu0 0
      %359 = vmatprep.subr.bf16.mxu0 0
      %360 = vmatpush1.bf16.msra.mxu0 %v343
      %361 = vmatprep.subr.bf16.mxu0 0
      %362 = vmatpush2.bf16.msra.mxu0 0
      %363 = vmatprep.subr.bf16.mxu0 0
      %364 = vmatpush2.bf16.msra.mxu0 0
      %365 = vmatprep.subr.bf16.mxu0 0
      %366 = vmatpush2.bf16.msra.mxu0 0
      %367 = vmatprep.subr.bf16.mxu0 0
      %368 = vmatpush2.bf16.msra.mxu0 0
      %369 = vmatprep.subr.bf16.mxu0 0
      %370 = vmatpush2.bf16.msra.mxu0 0
      %371 = vmatprep.subr.bf16.mxu0 0
      %372 = vmatpush2.bf16.msra.mxu0 0
      %373 = vmatprep.subr.bf16.mxu0 0
      %374 = vmatpush2.bf16.msra.mxu0 0
      %375 = vmatprep.subr.bf16.mxu0 0
      %376 = vmatpush2.bf16.msra.mxu0 0
      %377 = vmatprep.mubr.bf16.mxu0 0
      %378 = vmatmul.mubr.bf16.gmra.mxu0 %v330
      %v379 = vpop.f32.mrf.mxu0
      %v380 = vadd.f32 0.0, %v379
      %v381 = vpop.f32.mrf.mxu0
      %v382 = vpop.f32.mrf.mxu0
      %v383 = vadd.f32 0.0, %v382
      %v384 = vpop.f32.mrf.mxu0
      %385 = vmatprep.mubr.bf16.mxu0 0
      %386 = vmatmul.mubr.bf16.gmra.mxu0 %v333
      %v387 = vpop.f32.mrf.mxu0
      %v388 = vadd.f32 0.0, %v387
      %v389 = vpop.f32.mrf.mxu0
      %v390 = vpop.f32.mrf.mxu0
      %v391 = vadd.f32 0.0, %v390
      %v392 = vpop.f32.mrf.mxu0
      %393 = vmatprep.mubr.bf16.mxu0 0
      %394 = vmatmul.mubr.bf16.gmra.mxu0 %v336
      %v395 = vpop.f32.mrf.mxu0
      %v396 = vadd.f32 0.0, %v395
      %v397 = vpop.f32.mrf.mxu0
      %v398 = vpop.f32.mrf.mxu0
      %v399 = vadd.f32 0.0, %v398
      %v400 = vpop.f32.mrf.mxu0
      %401 = vmatprep.mubr.bf16.mxu0 0
      %402 = vmatmul.mubr.bf16.gmra.mxu0 %v339
      %v403 = vpop.f32.mrf.mxu0
      %v404 = vadd.f32 0.0, %v403
      %v405 = vpop.f32.mrf.mxu0
      %v406 = vpop.f32.mrf.mxu0
      %v407 = vadd.f32 0.0, %v406
      %v408 = vpop.f32.mrf.mxu0
      %409 = vdwg.mxu0
      %v410 = vpack.c.bf16 %v383, %v380
      %v411 = vpack.c.bf16 %v391, %v388
      %v412 = vpack.c.bf16 %v399, %v396
      %v413 = vpack.c.bf16 %v407, %v404
      %v418 = vunpack.c.l.b16 %v410
      %v419 = vunpack.c.h.b16 %v410
      %v420 = vunpack.c.l.b16 %v411
      %v421 = vunpack.c.h.b16 %v411
      %v422 = vunpack.c.l.b16 %v412
      %v423 = vunpack.c.h.b16 %v412
      %v424 = vunpack.c.l.b16 %v413
      %v425 = vunpack.c.h.b16 %v413
      %v426 = vpack.c.b16 %v418, %v418
      %v427 = vpack.c.b16 %v419, %v419
      %v428 = vpack.c.b16 %v420, %v420
      %v429 = vpack.c.b16 %v421, %v421
      %v430 = vpack.c.b16 %v422, %v422
      %v431 = vpack.c.b16 %v423, %v423
      %v432 = vpack.c.b16 %v424, %v424
      %v433 = vpack.c.b16 %v425, %v425
      %vm442 = vcmask 257024
      %443 = vst.msk [vmem:[%s266] sm:$0xf] %vm442, %v426
      %444 = vst.msk [vmem:[%s266 + $0x4] sm:$0xf] %vm442, %v427
      %445 = vst.msk [vmem:[%s266 + $0x8] sm:$0xf] %vm442, %v428
      %446 = vst.msk [vmem:[%s266 + $0xc] sm:$0xf] %vm442, %v429
      %447 = vst.msk [vmem:[%s266 + $0x10] sm:$0xf] %vm442, %v430
      %448 = vst.msk [vmem:[%s266 + $0x14] sm:$0xf] %vm442, %v431
      %449 = vst.msk [vmem:[%s266 + $0x18] sm:$0xf] %vm442, %v432
      %450 = vst.msk [vmem:[%s266 + $0x1c] sm:$0xf] %vm442, %v433
      %v451 = vlaneseq
      %v452 = vshrl.u32 %v451, 7
      %v453 = vadd.s32 %v452, 8
      %v454 = vadd.s32 %v452, 16
      %v455 = vadd.s32 %v452, 24
      %v456 = vadd.s32 %v452, 32
      %v457 = vadd.s32 %v452, 40
      %v458 = vadd.s32 %v452, 48
      %v459 = vadd.s32 %v452, 56
      %s460 = smul.u32 %s18, 64
      %v461 = vstv %s460
      %v462 = vadd.s32 %v452, %v461
      %v463 = vadd.s32 %v453, %v461
      %v464 = vadd.s32 %v454, %v461
      %v465 = vadd.s32 %v455, %v461
      %v466 = vadd.s32 %v456, %v461
      %v467 = vadd.s32 %v457, %v461
      %v468 = vadd.s32 %v458, %v461
      %v469 = vadd.s32 %v459, %v461
      %vm470 = vcmp.lt.s32.totalorder %v462, 512
      %vm471 = vcmp.lt.s32.totalorder %v463, 512
      %vm472 = vcmp.lt.s32.totalorder %v464, 512
      %vm473 = vcmp.lt.s32.totalorder %v465, 512
      %vm474 = vcmp.lt.s32.totalorder %v466, 512
      %vm475 = vcmp.lt.s32.totalorder %v467, 512
      %vm476 = vcmp.lt.s32.totalorder %v468, 512
      %vm477 = vcmp.lt.s32.totalorder %v469, 512
      %v478 = vsel %vm470, 1, 0
      %v479 = vsel %vm471, 1, 0
      %v480 = vsel %vm472, 1, 0
      %v481 = vsel %vm473, 1, 0
      %v482 = vsel %vm474, 1, 0
      %v483 = vsel %vm475, 1, 0
      %v484 = vsel %vm476, 1, 0
      %v485 = vsel %vm477, 1, 0
      %vm486 = vcmp.eq.s32.totalorder %v478, 1
      %vm487 = vcmp.eq.s32.totalorder %v479, 1
      %vm488 = vcmp.eq.s32.totalorder %v480, 1
      %vm489 = vcmp.eq.s32.totalorder %v481, 1
      %vm490 = vcmp.eq.s32.totalorder %v482, 1
      %vm491 = vcmp.eq.s32.totalorder %v483, 1
      %vm492 = vcmp.eq.s32.totalorder %v484, 1
      %vm493 = vcmp.eq.s32.totalorder %v485, 1
      %v494 = vsel %vm486, %v380, 0.0
      %v495 = vsel %vm487, %v383, 0.0
      %v496 = vsel %vm488, %v388, 0.0
      %v497 = vsel %vm489, %v391, 0.0
      %v498 = vsel %vm490, %v396, 0.0
      %v499 = vsel %vm491, %v399, 0.0
      %v500 = vsel %vm492, %v404, 0.0
      %v501 = vsel %vm493, %v407, 0.0
      %vm502 = vcmask 261120
      %v503 = vsel %vm502, %v494, 0.0
      %v504 = vsel %vm502, %v495, 0.0
      %v505 = vadd.f32 %v503, %v504
      %v506 = vsel %vm502, %v496, 0.0
      %v507 = vadd.f32 %v505, %v506
      %v508 = vsel %vm502, %v497, 0.0
      %v509 = vadd.f32 %v507, %v508
      %v510 = vsel %vm502, %v498, 0.0
      %v511 = vadd.f32 %v509, %v510
      %v512 = vsel %vm502, %v499, 0.0
      %v513 = vadd.f32 %v511, %v512
      %v514 = vsel %vm502, %v500, 0.0
      %v515 = vadd.f32 %v513, %v514
      %v516 = vsel %vm502, %v501, 0.0
      %v517 = vadd.f32 %v515, %v516
      %518 = vst.msk [vmem:[%s271] sm:$0xff] %vm502, %v517
      %v519 = vmul.f32 %v494, %v494
      %v520 = vmul.f32 %v495, %v495
      %v521 = vmul.f32 %v496, %v496
      %v522 = vmul.f32 %v497, %v497
      %v523 = vmul.f32 %v498, %v498
      %v524 = vmul.f32 %v499, %v499
      %v525 = vmul.f32 %v500, %v500
      %v526 = vmul.f32 %v501, %v501
      %v527 = vsel %vm502, %v519, 0.0
      %v528 = vsel %vm502, %v520, 0.0
      %v529 = vadd.f32 %v527, %v528
      %v530 = vsel %vm502, %v521, 0.0
      %v531 = vadd.f32 %v529, %v530
      %v532 = vsel %vm502, %v522, 0.0
      %v533 = vadd.f32 %v531, %v532
      %v534 = vsel %vm502, %v523, 0.0
      %v535 = vadd.f32 %v533, %v534
      %v536 = vsel %vm502, %v524, 0.0
      %v537 = vadd.f32 %v535, %v536
      %v538 = vsel %vm502, %v525, 0.0
      %v539 = vadd.f32 %v537, %v538
      %v540 = vsel %vm502, %v526, 0.0
      %v541 = vadd.f32 %v539, %v540
      %542 = vst.msk [vmem:[%s275] sm:$0xff] %vm502, %v541
      %s543 = smul.u32 8, %s18
      %p544 = scmp.lt.s32.totalorder %s543, 63
      %s545 = scalar_select %p544, %s543, 63
      %s546 = smul.addr %s545, 4
      %s547 = scalar_lea.vmem %s4, %s546
      %p548 = scmp.lt.s32.totalorder %s18, 7
      %s549 = scalar_select %p548, %s18, 7
      %s550 = smul.addr %s549, 8
      %s551 = scalar_lea.vmem %s5, %s550
      %p552 = scmp.lt.s32.totalorder %s18, 7
      %s553 = scalar_select %p552, %s18, 7
      %s554 = smul.addr %s553, 8
      %s555 = scalar_lea.vmem %s6, %s554
      // Predicated region
      $region37: #{dense_layer_forward.2} parent=35 // pred_check
        %p556 = pneg %p125
      $region38: #{dense_layer_forward.2} parent=35 // pred_check_branch
        %558 = sbr.rel (%p556) target = $region40
      $region39: #{dense_layer_forward.2} parent=35 // pred_region
        %s559 = smul.u32 8, %s18
      $region40: #{dense_layer_forward.2} parent=35 // pred_fallthru
        _
      // Predicated region
      $region41: #{dense_layer_forward.2} parent=35 // pred_check
        %p560 = pneg %p151
      $region42: #{dense_layer_forward.2} parent=35 // pred_check_branch
        %562 = sbr.rel (%p560) target = $region44
      $region43: #{dense_layer_forward.2} parent=35 // pred_region
        _
      $region44: #{dense_layer_forward.2} parent=35 // pred_fallthru
        _
      // Predicated region
      $region45: #{dense_layer_forward.2} parent=35 // pred_check
        %p563 = pneg %p177
      $region46: #{dense_layer_forward.2} parent=35 // pred_check_branch
        %565 = sbr.rel (%p563) target = $region48
      $region47: #{dense_layer_forward.2} parent=35 // pred_region
        _
      $region48: #{dense_layer_forward.2} parent=35 // pred_fallthru
        _
    $region36: #{dense_layer_forward.2} parent=5 // pred_fallthru
      _
    %p566 = scmp.le.s32.totalorder 2, %s13
    // Predicated region
    $region49: #{dense_layer_forward.2} parent=5 // pred_check
      %p567 = pneg %p566
    $region50: #{dense_layer_forward.2} parent=5 // pred_check_branch
      %569 = sbr.rel (%p567) target = $region52
    $region51: #{dense_layer_forward.2} parent=5 // pred_region
      %s570 = ssub.s32 %s13, 2
      // Predicated region
      $region53: #{dense_layer_forward.2} parent=51 // pred_check
        %p571 = pneg %p131
      $region54: #{dense_layer_forward.2} parent=51 // pred_check_branch
        %573 = sbr.rel (%p571) target = $region56
      $region55: #{dense_layer_forward.2} parent=51 // pred_region
        %s574 = smul.u32 8, %s19
        %p575 = scmp.lt.s32.totalorder %s574, 63
        %s576 = scalar_select %p575, %s574, 63
        %s577 = smul.addr %s576, 4
        %s578 = scalar_lea.vmem %s4, %s577
      $region56: #{dense_layer_forward.2} parent=51 // pred_fallthru
        _
      // Predicated region
      $region57: #{dense_layer_forward.2} parent=51 // pred_check
        %p579 = pneg %p157
      $region58: #{dense_layer_forward.2} parent=51 // pred_check_branch
        %581 = sbr.rel (%p579) target = $region60
      $region59: #{dense_layer_forward.2} parent=51 // pred_region
        %p582 = scmp.lt.s32.totalorder %s19, 7
        %s583 = scalar_select %p582, %s19, 7
        %s584 = smul.addr %s583, 8
        %s585 = scalar_lea.vmem %s5, %s584
      $region60: #{dense_layer_forward.2} parent=51 // pred_fallthru
        _
      // Predicated region
      $region61: #{dense_layer_forward.2} parent=51 // pred_check
        %p586 = pneg %p183
      $region62: #{dense_layer_forward.2} parent=51 // pred_check_branch
        %588 = sbr.rel (%p586) target = $region64
      $region63: #{dense_layer_forward.2} parent=51 // pred_region
        %p589 = scmp.lt.s32.totalorder %s19, 7
        %s590 = scalar_select %p589, %s19, 7
        %s591 = smul.addr %s590, 8
        %s592 = scalar_lea.vmem %s6, %s591
      $region64: #{dense_layer_forward.2} parent=51 // pred_fallthru
        _
    $region52: #{dense_layer_forward.2} parent=5 // pred_fallthru
      _
  $region6: #{dense_layer_forward.2} parent=0 // loop_footer
    %s17 = sadd.s32 1, %s13
  $region7: #{dense_layer_forward.2} parent=0 // loop_footer_branch
    %12 = sbr.rel target = $region3
  $region8: #{dense_layer_forward.2} parent=0 // loop_exit
    _

// kernel: dense_layer_forward.3
$region0: #{dense_layer_forward.3}
  #allocation0 [shape = 'u32[]', space=smem, size = 0x4, offset = 0x4, fixed_abs, tag = 'smem constant byte address 0x4 - core index']
  #allocation1 [shape = 'u32[144,128]{1,0:T(1,128)}', space=vmem, size = 0x12000, scoped, tag = 'internal scratch']
  %s0 = inlined_call_operand.vmem [shape: bf16[512,32], index: 0, kind: input, shape index: {}, may-alias: {0,1,2}]
  %s1 = inlined_call_operand.vmem [shape: bf16[512,32], index: 1, kind: input, shape index: {}, may-alias: {0,1,2}]
  %s2 = inlined_call_operand.vmem [shape: bf16[512,32], index: 2, kind: input, shape index: {}, may-alias: {0,1,2}]
  %s3 = inlined_call_operand.vmem [shape: f32[1,32], index: 3, kind: input, shape index: {}]
  %s4 = inlined_call_operand.vmem [shape: f32[1,32], index: 4, kind: input, shape index: {}]
  %s5 = inlined_call_operand.vmem [shape: bf16[32,72], index: 5, kind: input, shape index: {}]
  %s6 = inlined_call_operand.vmem [shape: f32[512,8], index: 6, kind: output, shape index: {}]
  %s7 = sld [smem:[#allocation0]]
  $region57: #{dense_layer_forward.3} parent=0
    _
  %s9 = ssub.s32 1, %s7
  %s10 = scalar_select 0, %s9, %s7
  loop: start=0, step=1, limit=10
  $region2: #{dense_layer_forward.3} parent=0 // loop_pre_header
    _
  $region3: #{dense_layer_forward.3} parent=0 // loop_header
    %s12 = sphi 0, %s16
    %p13 = scmp.ge.s32.totalorder %s12, 10
    %s22 = sphi 0, %s24
    %s25 = sphi 0, %s22
    %s26 = sphi 0, %s25
    %s42 = sphi 0, %s26
    %s56 = sphi 0, %s58
    %s59 = sphi 0, %s56
    %s60 = sphi 0, %s59
    %s76 = sphi 0, %s60
    %s90 = sphi 0, %s92
    %s93 = sphi 0, %s90
    %s94 = sphi 0, %s93
    %s110 = sphi 0, %s94
    %s114 = sphi 0, %s114
    %s116 = sphi 0, %s114
    %s117 = sphi 0, %s116
    %s131 = sphi 0, %s117
    %s135 = sphi 0, %s135
    %s137 = sphi 0, %s135
    %s138 = sphi 0, %s137
    %s152 = sphi 0, %s138
    %s156 = sphi 0, %s156
    %s158 = sphi 0, %s156
    %s159 = sphi 0, %s158
    %s173 = sphi 0, %s159
    %s179 = sphi 0, %s181
    %s182 = sphi 0, %s179
    %s183 = sphi 0, %s182
    %s199 = sphi 0, %s183
  $region4: #{dense_layer_forward.3} parent=0 // loop_header_branch
    %15 = sbr.rel (%p13) target = $region8
  $region5: #{dense_layer_forward.3} parent=0 // loop_body
    %s17 = ssub.s32 %s12, 1
    %s18 = ssub.s32 %s12, 2
    %s19 = sadd.s32 %s12, 1
    %s20 = ssub.s32 %s12, %s19
    %p21 = scmp.eq.s32.totalorder %s20, 0
    %s23 = sadd.s32 %s22, 1
    %s24 = scalar_select %p21, %s22, %s23
    %p27 = pneg %p21
    %p28 = scmp.eq.s32.totalorder %s12, 7
    %p29 = por %p27, %p28
    %p30 = scmp.ne.s32.totalorder %s22, %s25
    %p31 = scmp.eq.s32.totalorder %s12, 0
    %p32 = por %p30, %p31
    %p33 = scmp.ne.s32.totalorder %s22, %s25
    %p34 = scmp.eq.s32.totalorder %s17, 7
    %p35 = por %p33, %p34
    %p36 = scmp.ne.s32.totalorder %s25, %s26
    %p37 = scmp.eq.s32.totalorder %s17, 0
    %p38 = por %p36, %p37
    %p39 = scmp.ne.s32.totalorder %s25, %s26
    %p40 = scmp.eq.s32.totalorder %s18, 7
    %p41 = por %p39, %p40
    %p43 = scmp.ne.s32.totalorder %s26, %s42
    %p44 = scmp.eq.s32.totalorder %s18, 0
    %p45 = por %p43, %p44
    %s46 = smul.u32 %s12, 4
    %s47 = ssub.s32 %s46, 1
    %p48 = scmp.gt.s32.totalorder %s47, 0
    %s49 = scalar_select %p48, %s47, 0
    %s50 = smul.u32 %s19, 4
    %s51 = ssub.s32 %s50, 1
    %p52 = scmp.gt.s32.totalorder %s51, 0
    %s53 = scalar_select %p52, %s51, 0
    %s54 = ssub.s32 %s49, %s53
    %p55 = scmp.eq.s32.totalorder %s54, 0
    %s57 = sadd.s32 %s56, 1
    %s58 = scalar_select %p55, %s56, %s57
    %p61 = pneg %p55
    %p62 = scmp.eq.s32.totalorder %s12, 7
    %p63 = por %p61, %p62
    %p64 = scmp.ne.s32.totalorder %s56, %s59
    %p65 = scmp.eq.s32.totalorder %s12, 0
    %p66 = por %p64, %p65
    %p67 = scmp.ne.s32.totalorder %s56, %s59
    %p68 = scmp.eq.s32.totalorder %s17, 7
    %p69 = por %p67, %p68
    %p70 = scmp.ne.s32.totalorder %s59, %s60
    %p71 = scmp.eq.s32.totalorder %s17, 0
    %p72 = por %p70, %p71
    %p73 = scmp.ne.s32.totalorder %s59, %s60
    %p74 = scmp.eq.s32.totalorder %s18, 7
    %p75 = por %p73, %p74
    %p77 = scmp.ne.s32.totalorder %s60, %s76
    %p78 = scmp.eq.s32.totalorder %s18, 0
    %p79 = por %p77, %p78
    %s80 = smul.u32 %s12, 4
    %s81 = sadd.s32 %s80, 4
    %p82 = scmp.lt.s32.totalorder %s81, 31
    %s83 = scalar_select %p82, %s81, 31
    %s84 = smul.u32 %s19, 4
    %s85 = sadd.s32 %s84, 4
    %p86 = scmp.lt.s32.totalorder %s85, 31
    %s87 = scalar_select %p86, %s85, 31
    %s88 = ssub.s32 %s83, %s87
    %p89 = scmp.eq.s32.totalorder %s88, 0
    %s91 = sadd.s32 %s90, 1
    %s92 = scalar_select %p89, %s90, %s91
    %p95 = pneg %p89
    %p96 = scmp.eq.s32.totalorder %s12, 7
    %p97 = por %p95, %p96
    %p98 = scmp.ne.s32.totalorder %s90, %s93
    %p99 = scmp.eq.s32.totalorder %s12, 0
    %p100 = por %p98, %p99
    %p101 = scmp.ne.s32.totalorder %s90, %s93
    %p102 = scmp.eq.s32.totalorder %s17, 7
    %p103 = por %p101, %p102
    %p104 = scmp.ne.s32.totalorder %s93, %s94
    %p105 = scmp.eq.s32.totalorder %s17, 0
    %p106 = por %p104, %p105
    %p107 = scmp.ne.s32.totalorder %s93, %s94
    %p108 = scmp.eq.s32.totalorder %s18, 7
    %p109 = por %p107, %p108
    %p111 = scmp.ne.s32.totalorder %s94, %s110
    %p112 = scmp.eq.s32.totalorder %s18, 0
    %p113 = por %p111, %p112
    %s115 = sadd.s32 %s114, 1
    %p118 = scmp.eq.s32.totalorder %s12, 7
    %p119 = scmp.ne.s32.totalorder %s114, %s116
    %p120 = scmp.eq.s32.totalorder %s12, 0
    %p121 = por %p119, %p120
    %p122 = scmp.ne.s32.totalorder %s114, %s116
    %p123 = scmp.eq.s32.totalorder %s17, 7
    %p124 = por %p122, %p123
    %p125 = scmp.ne.s32.totalorder %s116, %s117
    %p126 = scmp.eq.s32.totalorder %s17, 0
    %p127 = por %p125, %p126
    %p128 = scmp.ne.s32.totalorder %s116, %s117
    %p129 = scmp.eq.s32.totalorder %s18, 7
    %p130 = por %p128, %p129
    %p132 = scmp.ne.s32.totalorder %s117, %s131
    %p133 = scmp.eq.s32.totalorder %s18, 0
    %p134 = por %p132, %p133
    %s136 = sadd.s32 %s135, 1
    %p139 = scmp.eq.s32.totalorder %s12, 7
    %p140 = scmp.ne.s32.totalorder %s135, %s137
    %p141 = scmp.eq.s32.totalorder %s12, 0
    %p142 = por %p140, %p141
    %p143 = scmp.ne.s32.totalorder %s135, %s137
    %p144 = scmp.eq.s32.totalorder %s17, 7
    %p145 = por %p143, %p144
    %p146 = scmp.ne.s32.totalorder %s137, %s138
    %p147 = scmp.eq.s32.totalorder %s17, 0
    %p148 = por %p146, %p147
    %p149 = scmp.ne.s32.totalorder %s137, %s138
    %p150 = scmp.eq.s32.totalorder %s18, 7
    %p151 = por %p149, %p150
    %p153 = scmp.ne.s32.totalorder %s138, %s152
    %p154 = scmp.eq.s32.totalorder %s18, 0
    %p155 = por %p153, %p154
    %s157 = sadd.s32 %s156, 1
    %p160 = scmp.eq.s32.totalorder %s12, 7
    %p161 = scmp.ne.s32.totalorder %s156, %s158
    %p162 = scmp.eq.s32.totalorder %s12, 0
    %p163 = por %p161, %p162
    %p164 = scmp.ne.s32.totalorder %s156, %s158
    %p165 = scmp.eq.s32.totalorder %s17, 7
    %p166 = por %p164, %p165
    %p167 = scmp.ne.s32.totalorder %s158, %s159
    %p168 = scmp.eq.s32.totalorder %s17, 0
    %p169 = por %p167, %p168
    %p170 = scmp.ne.s32.totalorder %s158, %s159
    %p171 = scmp.eq.s32.totalorder %s18, 7
    %p172 = por %p170, %p171
    %p174 = scmp.ne.s32.totalorder %s159, %s173
    %p175 = scmp.eq.s32.totalorder %s18, 0
    %p176 = por %p174, %p175
    %s177 = ssub.s32 %s12, %s19
    %p178 = scmp.eq.s32.totalorder %s177, 0
    %s180 = sadd.s32 %s179, 1
    %s181 = scalar_select %p178, %s179, %s180
    %p184 = pneg %p178
    %p185 = scmp.eq.s32.totalorder %s12, 7
    %p186 = por %p184, %p185
    %p187 = scmp.ne.s32.totalorder %s179, %s182
    %p188 = scmp.eq.s32.totalorder %s12, 0
    %p189 = por %p187, %p188
    %p190 = scmp.ne.s32.totalorder %s179, %s182
    %p191 = scmp.eq.s32.totalorder %s17, 7
    %p192 = por %p190, %p191
    %p193 = scmp.ne.s32.totalorder %s182, %s183
    %p194 = scmp.eq.s32.totalorder %s17, 0
    %p195 = por %p193, %p194
    %p196 = scmp.ne.s32.totalorder %s182, %s183
    %p197 = scmp.eq.s32.totalorder %s18, 7
    %p198 = por %p196, %p197
    %p200 = scmp.ne.s32.totalorder %s183, %s199
    %p201 = scmp.eq.s32.totalorder %s18, 0
    %p202 = por %p200, %p201
    %p203 = scmp.le.s32.totalorder 1, %s12
    %p204 = scmp.lt.s32.totalorder %s12, 9
    %p205 = pnand %p203, %p204
    %p206 = pneg %p205
    // Predicated region
    $region9: #{dense_layer_forward.3} parent=5 // pred_check
      _
    $region10: #{dense_layer_forward.3} parent=5 // pred_check_branch
      %208 = sbr.rel (%p205) target = $region12
    $region11: #{dense_layer_forward.3} parent=5 // pred_region
      %s209 = ssub.s32 %s12, 1
      // Predicated region
      $region13: #{dense_layer_forward.3} parent=11 // pred_check
        %p210 = pneg %p127
      $region14: #{dense_layer_forward.3} parent=11 // pred_check_branch
        %212 = sbr.rel (%p210) target = $region16
      $region15: #{dense_layer_forward.3} parent=11 // pred_region
        _
      $region16: #{dense_layer_forward.3} parent=11 // pred_fallthru
        _
      // Predicated region
      $region17: #{dense_layer_forward.3} parent=11 // pred_check
        %p213 = pneg %p148
      $region18: #{dense_layer_forward.3} parent=11 // pred_check_branch
        %215 = sbr.rel (%p213) target = $region20
      $region19: #{dense_layer_forward.3} parent=11 // pred_region
        _
      $region20: #{dense_layer_forward.3} parent=11 // pred_fallthru
        _
      // Predicated region
      $region21: #{dense_layer_forward.3} parent=11 // pred_check
        %p216 = pneg %p169
      $region22: #{dense_layer_forward.3} parent=11 // pred_check_branch
        %218 = sbr.rel (%p216) target = $region24
      $region23: #{dense_layer_forward.3} parent=11 // pred_region
        _
      $region24: #{dense_layer_forward.3} parent=11 // pred_fallthru
        _
    $region12: #{dense_layer_forward.3} parent=5 // pred_fallthru
      _
    %p219 = scmp.lt.s32.totalorder %s12, 8
    // Predicated region
    $region25: #{dense_layer_forward.3} parent=5 // pred_check
      %p220 = pneg %p219
    $region26: #{dense_layer_forward.3} parent=5 // pred_check_branch
      %222 = sbr.rel (%p220) target = $region28
    $region27: #{dense_layer_forward.3} parent=5 // pred_region
      // Predicated region
      $region29: #{dense_layer_forward.3} parent=27 // pred_check
        %p223 = pneg %p32
      $region30: #{dense_layer_forward.3} parent=27 // pred_check_branch
        %225 = sbr.rel (%p223) target = $region32
      $region31: #{dense_layer_forward.3} parent=27 // pred_region
        %s226 = smul.u32 8, %s12
        %p227 = scmp.lt.s32.totalorder %s226, 63
        %s228 = scalar_select %p227, %s226, 63
        %s229 = smul.addr %s228, 4
        %s230 = scalar_lea.vmem %s0, %s229
        %s231 = smul.u32 8, %s12
      $region32: #{dense_layer_forward.3} parent=27 // pred_fallthru
        _
      // Predicated region
      $region33: #{dense_layer_forward.3} parent=27 // pred_check
        %p232 = pneg %p66
      $region34: #{dense_layer_forward.3} parent=27 // pred_check_branch
        %234 = sbr.rel (%p232) target = $region36
      $region35: #{dense_layer_forward.3} parent=27 // pred_region
        %s235 = smul.u32 %s12, 4
        %s236 = ssub.s32 %s235, 1
        %p237 = scmp.gt.s32.totalorder %s236, 0
        %s238 = scalar_select %p237, %s236, 0
        %s239 = smul.u32 2, %s238
        %p240 = scmp.lt.s32.totalorder %s239, 63
        %s241 = scalar_select %p240, %s239, 63
        %s242 = smul.addr %s241, 4
        %s243 = scalar_lea.vmem %s1, %s242
        %s244 = smul.u32 %s12, 4
        %s245 = ssub.s32 %s244, 1
        %p246 = scmp.gt.s32.totalorder %s245, 0
        %s247 = scalar_select %p246, %s245, 0
        %s248 = smul.u32 2, %s247
      $region36: #{dense_layer_forward.3} parent=27 // pred_fallthru
        _
      // Predicated region
      $region37: #{dense_layer_forward.3} parent=27 // pred_check
        %p249 = pneg %p100
      $region38: #{dense_layer_forward.3} parent=27 // pred_check_branch
        %251 = sbr.rel (%p249) target = $region40
      $region39: #{dense_layer_forward.3} parent=27 // pred_region
        %s252 = smul.u32 %s12, 4
        %s253 = sadd.s32 %s252, 4
        %p254 = scmp.lt.s32.totalorder %s253, 31
        %s255 = scalar_select %p254, %s253, 31
        %s256 = smul.u32 2, %s255
        %p257 = scmp.lt.s32.totalorder %s256, 63
        %s258 = scalar_select %p257, %s256, 63
        %s259 = smul.addr %s258, 4
        %s260 = scalar_lea.vmem %s2, %s259
        %s261 = smul.u32 %s12, 4
        %s262 = sadd.s32 %s261, 4
        %p263 = scmp.lt.s32.totalorder %s262, 31
        %s264 = scalar_select %p263, %s262, 31
        %s265 = smul.u32 2, %s264
      $region40: #{dense_layer_forward.3} parent=27 // pred_fallthru
        _
    $region28: #{dense_layer_forward.3} parent=5 // pred_fallthru
      _
    %p266 = scmp.le.s32.totalorder 1, %s12
    %p267 = scmp.lt.s32.totalorder %s12, 9
    %p268 = pnand %p266, %p267
    %p269 = pneg %p268
    // Predicated region
    $region41: #{dense_layer_forward.3} parent=5 // pred_check
      _
    $region42: #{dense_layer_forward.3} parent=5 // pred_check_branch
      %271 = sbr.rel (%p268) target = $region44
    $region43: #{dense_layer_forward.3} parent=5 // pred_region
      %s272 = ssub.s32 %s12, 1
      %s273 = smul.u32 8, %s17
      %p274 = scmp.lt.s32.totalorder %s273, 63
      %s275 = scalar_select %p274, %s273, 63
      %s276 = smul.addr %s275, 4
      %s277 = scalar_lea.vmem %s0, %s276
      %p278 = pneg %p38
      %p279 = pneg %p35
      %s280 = smul.u32 %s17, 4
      %s281 = ssub.s32 %s280, 1
      %p282 = scmp.gt.s32.totalorder %s281, 0
      %s283 = scalar_select %p282, %s281, 0
      %s284 = smul.u32 2, %s283
      %p285 = scmp.lt.s32.totalorder %s284, 63
      %s286 = scalar_select %p285, %s284, 63
      %s287 = smul.addr %s286, 4
      %s288 = scalar_lea.vmem %s1, %s287
      %p289 = pneg %p72
      %p290 = pneg %p69
      %s291 = smul.u32 %s17, 4
      %s292 = sadd.s32 %s291, 4
      %p293 = scmp.lt.s32.totalorder %s292, 31
      %s294 = scalar_select %p293, %s292, 31
      %s295 = smul.u32 2, %s294
      %p296 = scmp.lt.s32.totalorder %s295, 63
      %s297 = scalar_select %p296, %s295, 63
      %s298 = smul.addr %s297, 4
      %s299 = scalar_lea.vmem %s2, %s298
      %p300 = pneg %p106
      %p301 = pneg %p103
      %p302 = pneg %p127
      %p303 = pneg %p124
      %p304 = pneg %p148
      %p305 = pneg %p145
      %p306 = pneg %p169
      %p307 = pneg %p166
      %p308 = pneg %p195
      %p309 = pneg %p192
      %s310 = smul.u32 8, %s17
      %p311 = scmp.lt.s32.totalorder %s310, 63
      %s312 = scalar_select %p311, %s310, 63
      %s313 = smul.addr %s312, 8
      %s314 = scalar_lea.vmem %s6, %s313
      %s315 = smul.u32 8, %s17
      %p316 = scmp.lt.s32.totalorder %s315, 63
      %s317 = scalar_select %p316, %s315, 63
      %s318 = smul.addr %s317, 4
      %s319 = scalar_lea.vmem %s0, %s318
      %s320 = smul.u32 8, %s17
      %s321 = smul.u32 %s17, 4
      %s322 = ssub.s32 %s321, 1
      %p323 = scmp.gt.s32.totalorder %s322, 0
      %s324 = scalar_select %p323, %s322, 0
      %s325 = smul.u32 2, %s324
      %p326 = scmp.lt.s32.totalorder %s325, 63
      %s327 = scalar_select %p326, %s325, 63
      %s328 = smul.addr %s327, 4
      %s329 = scalar_lea.vmem %s1, %s328
      %s330 = smul.u32 %s17, 4
      %s331 = ssub.s32 %s330, 1
      %p332 = scmp.gt.s32.totalorder %s331, 0
      %s333 = scalar_select %p332, %s331, 0
      %s334 = smul.u32 2, %s333
      %s335 = smul.u32 %s17, 4
      %s336 = sadd.s32 %s335, 4
      %p337 = scmp.lt.s32.totalorder %s336, 31
      %s338 = scalar_select %p337, %s336, 31
      %s339 = smul.u32 2, %s338
      %p340 = scmp.lt.s32.totalorder %s339, 63
      %s341 = scalar_select %p340, %s339, 63
      %s342 = smul.addr %s341, 4
      %s343 = scalar_lea.vmem %s2, %s342
      %s344 = smul.u32 %s17, 4
      %s345 = sadd.s32 %s344, 4
      %p346 = scmp.lt.s32.totalorder %s345, 31
      %s347 = scalar_select %p346, %s345, 31
      %s348 = smul.u32 2, %s347
      %s349 = smul.u32 8, %s17
      %p350 = scmp.lt.s32.totalorder %s349, 63
      %s351 = scalar_select %p350, %s349, 63
      %s352 = smul.addr %s351, 8
      %s353 = scalar_lea.vmem %s6, %s352
      %s354 = smul.u32 8, %s17
      %s356 = smul.u32 %s17, 4
      %v357 = vld [vmem:[%s3] sm:$0x1]
      %v358 = vld [vmem:[%s4] sm:$0x1]
      %p359 = scmp.lt.s32.totalorder %s356, 0
      %s360 = ssub.s32 0, %s356
      %s361 = scalar_select %p359, %s360, %s356
      %s362 = sand.u32 %s361, 15
      %s363 = ssub.s32 0, %s362
      %s364 = scalar_select %p359, %s363, %s362
      %p365 = scmp.ne.s32.totalorder %s364, 0
      %p366 = scmp.lt.s32.totalorder %s364, 0
      %p367 = pnand %p366, %p365
      %p368 = pneg %p367
      %s369 = sadd.s32 %s364, 16
      %s370 = scalar_select %p368, %s369, %s364
      %p371 = scmp.ne.s32.totalorder %s370, 0
      %s372 = scalar_select %p371, 1, 0
      %s373 = scvt.s32.f32 %s372
      %s374 = sadd.s32 %s356, 4
      %p375 = scmp.lt.s32.totalorder %s374, 0
      %s376 = ssub.s32 0, %s374
      %s377 = scalar_select %p375, %s376, %s374
      %s378 = sand.u32 %s377, 15
      %s379 = ssub.s32 0, %s378
      %s380 = scalar_select %p375, %s379, %s378
      %p381 = scmp.ne.s32.totalorder %s380, 0
      %p382 = scmp.lt.s32.totalorder %s380, 0
      %p383 = pnand %p382, %p381
      %p384 = pneg %p383
      %s385 = sadd.s32 %s380, 16
      %s386 = scalar_select %p384, %s385, %s380
      %p387 = scmp.ne.s32.totalorder %s386, 0
      %s388 = scalar_select %p387, 1, 0
      %s389 = scvt.s32.f32 %s388
      %v390 = vld [vmem:[%s329] sm:$0xf]
      %v391 = vld [vmem:[%s329 + $0x4] sm:$0xf]
      %v392 = vunpack.c.l.bf16 %v390
      %v393 = vunpack.c.l.bf16 %v391
      %v395 = vlaneseq
      %v396 = vshrl.u32 %v395, 7
      %v397 = vsub.s32 0, %v396
      %v398 = vrot.slane %v357, %v397
      %v400 = vmul.f32 %v392, %v398
      %v401 = vmul.f32 %v393, %v398
      %v403 = vlaneseq
      %v404 = vshrl.u32 %v403, 7
      %v405 = vsub.s32 0, %v404
      %v406 = vrot.slane %v358, %v405
      %v408 = vadd.f32 %v400, %v406
      %v409 = vadd.f32 %v401, %v406
      %v410 = vmax.f32 %v408, 0.0
      %v411 = vmax.f32 %v409, 0.0
      %v412 = vstv %s373
      %v413 = vmul.f32 %v410, %v412
      %v414 = vmul.f32 %v411, %v412
      %v415 = vpack.c.bf16 %v414, %v413
      %v416 = vld [vmem:[%s319] sm:$0xf]
      %v417 = vld [vmem:[%s319 + $0x4] sm:$0xf]
      %v418 = vld [vmem:[%s319 + $0x8] sm:$0xf]
      %v419 = vld [vmem:[%s319 + $0xc] sm:$0xf]
      %v420 = vld [vmem:[%s319 + $0x10] sm:$0xf]
      %v421 = vld [vmem:[%s319 + $0x14] sm:$0xf]
      %v422 = vld [vmem:[%s319 + $0x18] sm:$0xf]
      %v423 = vld [vmem:[%s319 + $0x1c] sm:$0xf]
      %v424 = vunpack.c.l.bf16 %v416
      %v425 = vunpack.c.l.bf16 %v417
      %v426 = vunpack.c.l.bf16 %v418
      %v427 = vunpack.c.l.bf16 %v419
      %v428 = vunpack.c.l.bf16 %v420
      %v429 = vunpack.c.l.bf16 %v421
      %v430 = vunpack.c.l.bf16 %v422
      %v431 = vunpack.c.l.bf16 %v423
      %v432 = vmul.f32 %v424, %v398
      %v433 = vmul.f32 %v425, %v398
      %v434 = vmul.f32 %v426, %v398
      %v435 = vmul.f32 %v427, %v398
      %v436 = vmul.f32 %v428, %v398
      %v437 = vmul.f32 %v429, %v398
      %v438 = vmul.f32 %v430, %v398
      %v439 = vmul.f32 %v431, %v398
      %v440 = vadd.f32 %v432, %v406
      %v441 = vadd.f32 %v433, %v406
      %v442 = vadd.f32 %v434, %v406
      %v443 = vadd.f32 %v435, %v406
      %v444 = vadd.f32 %v436, %v406
      %v445 = vadd.f32 %v437, %v406
      %v446 = vadd.f32 %v438, %v406
      %v447 = vadd.f32 %v439, %v406
      %v448 = vmax.f32 %v440, 0.0
      %v449 = vmax.f32 %v441, 0.0
      %v450 = vmax.f32 %v442, 0.0
      %v451 = vmax.f32 %v443, 0.0
      %v452 = vmax.f32 %v444, 0.0
      %v453 = vmax.f32 %v445, 0.0
      %v454 = vmax.f32 %v446, 0.0
      %v455 = vmax.f32 %v447, 0.0
      %v456 = vpack.c.bf16 %v449, %v448
      %v457 = vpack.c.bf16 %v451, %v450
      %v458 = vpack.c.bf16 %v453, %v452
      %v459 = vpack.c.bf16 %v455, %v454
      %v460 = vld [vmem:[%s343] sm:$0xf]
      %v461 = vld [vmem:[%s343 + $0x4] sm:$0xf]
      %v462 = vunpack.c.l.bf16 %v460
      %v463 = vunpack.c.l.bf16 %v461
      %v464 = vmul.f32 %v462, %v398
      %v465 = vmul.f32 %v463, %v398
      %v466 = vadd.f32 %v464, %v406
      %v467 = vadd.f32 %v465, %v406
      %v468 = vmax.f32 %v466, 0.0
      %v469 = vmax.f32 %v467, 0.0
      %v470 = vstv %s389
      %v471 = vmul.f32 %v468, %v470
      %v472 = vmul.f32 %v469, %v470
      %v473 = vpack.c.bf16 %v472, %v471
      %v474 = vld [vmem:[%s5] sm:$0xf]
      %v475 = vld [vmem:[%s5 + $0x4] sm:$0xf]
      %v476 = vld [vmem:[%s5 + $0x8] sm:$0xf]
      %v477 = vld [vmem:[%s5 + $0xc] sm:$0xf]
      %v482 = vunpack.c.l.b16 %v474
      %v483 = vunpack.c.l.b16 %v475
      %v484 = vunpack.c.l.b16 %v476
      %v485 = vunpack.c.l.b16 %v477
      %v486 = vpack.c.b16 %v483, %v482
      %v487 = vpack.c.b16 %v485, %v484
      %vm490 = vcmask 261120
      %v492 = vsel %vm490, %v415, 0
      %v495 = vsel %vm490, %v456, 0
      %v498 = vsel %vm490, %v457, 0
      %v501 = vsel %vm490, %v458, 0
      %v504 = vsel %vm490, %v459, 0
      %v507 = vsel %vm490, %v473, 0
      %509 = vmatprep.subr.bf16.mxu0 0
      %510 = vmatpush1.bf16.msra.mxu0 0
      %511 = vmatprep.subr.bf16.mxu0 0
      %512 = vmatpush1.bf16.msra.mxu0 0
      %513 = vmatprep.subr.bf16.mxu0 0
      %514 = vmatpush1.bf16.msra.mxu0 0
      %515 = vmatprep.subr.bf16.mxu0 0
      %516 = vmatpush1.bf16.msra.mxu0 0
      %517 = vmatprep.subr.bf16.mxu0 0
      %518 = vmatpush1.bf16.msra.mxu0 0
      %519 = vmatprep.subr.bf16.mxu0 0
      %520 = vmatpush1.bf16.msra.mxu0 0
      %521 = vmatprep.subr.bf16.mxu0 0
      %522 = vmatpush1.bf16.msra.mxu0 %v487
      %523 = vmatprep.subr.bf16.mxu0 0
      %524 = vmatpush1.bf16.msra.mxu0 %v486
      %525 = vmatprep.subr.bf16.mxu0 0
      %526 = vmatpush2.bf16.msra.mxu0 0
      %527 = vmatprep.subr.bf16.mxu0 0
      %528 = vmatpush2.bf16.msra.mxu0 0
      %529 = vmatprep.subr.bf16.mxu0 0
      %530 = vmatpush2.bf16.msra.mxu0 0
      %531 = vmatprep.subr.bf16.mxu0 0
      %532 = vmatpush2.bf16.msra.mxu0 0
      %533 = vmatprep.subr.bf16.mxu0 0
      %534 = vmatpush2.bf16.msra.mxu0 0
      %535 = vmatprep.subr.bf16.mxu0 0
      %536 = vmatpush2.bf16.msra.mxu0 0
      %537 = vmatprep.subr.bf16.mxu0 0
      %538 = vmatpush2.bf16.msra.mxu0 0
      %539 = vmatprep.subr.bf16.mxu0 0
      %540 = vmatpush2.bf16.msra.mxu0 0
      %541 = vmatprep.mubr.bf16.mxu0 0
      %542 = vmatmul.mubr.bf16.gmra.mxu0 %v492
      %v543 = vpop.f32.mrf.mxu0
      %v544 = vadd.f32 0.0, %v543
      %v545 = vpop.f32.mrf.mxu0
      %v546 = vpop.f32.mrf.mxu0
      %v547 = vadd.f32 0.0, %v546
      %v548 = vpop.f32.mrf.mxu0
      %549 = vmatprep.mubr.bf16.mxu0 0
      %550 = vmatmul.mubr.bf16.gmra.mxu0 %v495
      %v551 = vpop.f32.mrf.mxu0
      %v552 = vadd.f32 0.0, %v551
      %v553 = vpop.f32.mrf.mxu0
      %v554 = vpop.f32.mrf.mxu0
      %v555 = vadd.f32 0.0, %v554
      %v556 = vpop.f32.mrf.mxu0
      %557 = vmatprep.mubr.bf16.mxu0 0
      %558 = vmatmul.mubr.bf16.gmra.mxu0 %v498
      %v559 = vpop.f32.mrf.mxu0
      %v560 = vadd.f32 0.0, %v559
      %v561 = vpop.f32.mrf.mxu0
      %v562 = vpop.f32.mrf.mxu0
      %v563 = vadd.f32 0.0, %v562
      %v564 = vpop.f32.mrf.mxu0
      %565 = vmatprep.mubr.bf16.mxu0 0
      %566 = vmatmul.mubr.bf16.gmra.mxu0 %v501
      %v567 = vpop.f32.mrf.mxu0
      %v568 = vadd.f32 0.0, %v567
      %v569 = vpop.f32.mrf.mxu0
      %v570 = vpop.f32.mrf.mxu0
      %v571 = vadd.f32 0.0, %v570
      %v572 = vpop.f32.mrf.mxu0
      %573 = vmatprep.mubr.bf16.mxu0 0
      %574 = vmatmul.mubr.bf16.gmra.mxu0 %v504
      %v575 = vpop.f32.mrf.mxu0
      %v576 = vadd.f32 0.0, %v575
      %v577 = vpop.f32.mrf.mxu0
      %v578 = vpop.f32.mrf.mxu0
      %v579 = vadd.f32 0.0, %v578
      %v580 = vpop.f32.mrf.mxu0
      %581 = vmatprep.mubr.bf16.mxu0 0
      %582 = vmatmul.mubr.bf16.gmra.mxu0 %v507
      %v583 = vpop.f32.mrf.mxu0
      %v584 = vadd.f32 0.0, %v583
      %v585 = vpop.f32.mrf.mxu0
      %v586 = vpop.f32.mrf.mxu0
      %v587 = vadd.f32 0.0, %v586
      %v588 = vpop.f32.mrf.mxu0
      %589 = vdwg.mxu0
      %v590 = vlaneseq
      %v591 = vshrl.u32 %v590, 7
      %v592 = vadd.s32 %v591, 8
      %v593 = vadd.s32 %v591, 16
      %v594 = vadd.s32 %v591, 24
      %v595 = vadd.s32 %v591, 32
      %v596 = vadd.s32 %v591, 40
      %v597 = vadd.s32 %v591, 48
      %v598 = vadd.s32 %v591, 56
      %vm599 = vcmp.lt.s32.totalorder %v591, 0
      %v600 = vsub.s32 0, %v591
      %v601 = vsel %vm599, %v600, %v591
      %v602 = vshrl.u32 %v601, 4
      %v603 = vand.u32 %v601, 15
      %v604 = vsub.s32 0, %v603
      %v605 = vsel %vm599, %v604, %v603
      %vm606 = vcmp.lt.s32.totalorder %v592, 0
      %v607 = vsub.s32 0, %v592
      %v608 = vsel %vm606, %v607, %v592
      %v609 = vshrl.u32 %v608, 4
      %v610 = vand.u32 %v608, 15
      %v611 = vsub.s32 0, %v610
      %v612 = vsel %vm606, %v611, %v610
      %vm613 = vcmp.lt.s32.totalorder %v593, 0
      %v614 = vsub.s32 0, %v593
      %v615 = vsel %vm613, %v614, %v593
      %v616 = vshrl.u32 %v615, 4
      %v617 = vand.u32 %v615, 15
      %v618 = vsub.s32 0, %v617
      %v619 = vsel %vm613, %v618, %v617
      %vm620 = vcmp.lt.s32.totalorder %v594, 0
      %v621 = vsub.s32 0, %v594
      %v622 = vsel %vm620, %v621, %v594
      %v623 = vshrl.u32 %v622, 4
      %v624 = vand.u32 %v622, 15
      %v625 = vsub.s32 0, %v624
      %v626 = vsel %vm620, %v625, %v624
      %vm627 = vcmp.lt.s32.totalorder %v595, 0
      %v628 = vsub.s32 0, %v595
      %v629 = vsel %vm627, %v628, %v595
      %v630 = vshrl.u32 %v629, 4
      %v631 = vand.u32 %v629, 15
      %v632 = vsub.s32 0, %v631
      %v633 = vsel %vm627, %v632, %v631
      %vm634 = vcmp.lt.s32.totalorder %v596, 0
      %v635 = vsub.s32 0, %v596
      %v636 = vsel %vm634, %v635, %v596
      %v637 = vshrl.u32 %v636, 4
      %v638 = vand.u32 %v636, 15
      %v639 = vsub.s32 0, %v638
      %v640 = vsel %vm634, %v639, %v638
      %vm641 = vcmp.lt.s32.totalorder %v597, 0
      %v642 = vsub.s32 0, %v597
      %v643 = vsel %vm641, %v642, %v597
      %v644 = vshrl.u32 %v643, 4
      %v645 = vand.u32 %v643, 15
      %v646 = vsub.s32 0, %v645
      %v647 = vsel %vm641, %v646, %v645
      %vm648 = vcmp.lt.s32.totalorder %v598, 0
      %v649 = vsub.s32 0, %v598
      %v650 = vsel %vm648, %v649, %v598
      %v651 = vshrl.u32 %v650, 4
      %v652 = vand.u32 %v650, 15
      %v653 = vsub.s32 0, %v652
      %v654 = vsel %vm648, %v653, %v652
      %vm655 = vcmp.ne.s32.totalorder %v605, 0
      %vm656 = vcmp.ne.s32.totalorder %v612, 0
      %vm657 = vcmp.ne.s32.totalorder %v619, 0
      %vm658 = vcmp.ne.s32.totalorder %v626, 0
      %vm659 = vcmp.ne.s32.totalorder %v633, 0
      %vm660 = vcmp.ne.s32.totalorder %v640, 0
      %vm661 = vcmp.ne.s32.totalorder %v647, 0
      %vm662 = vcmp.ne.s32.totalorder %v654, 0
      %vm663 = vcmp.lt.s32.totalorder %v605, 0
      %vm664 = vcmp.lt.s32.totalorder %v612, 0
      %vm665 = vcmp.lt.s32.totalorder %v619, 0
      %vm666 = vcmp.lt.s32.totalorder %v626, 0
      %vm667 = vcmp.lt.s32.totalorder %v633, 0
      %vm668 = vcmp.lt.s32.totalorder %v640, 0
      %vm669 = vcmp.lt.s32.totalorder %v647, 0
      %vm670 = vcmp.lt.s32.totalorder %v654, 0
      %vm671 = vmand %vm663, %vm655
      %vm672 = vmand %vm664, %vm656
      %vm673 = vmand %vm665, %vm657
      %vm674 = vmand %vm666, %vm658
      %vm675 = vmand %vm667, %vm659
      %vm676 = vmand %vm668, %vm660
      %vm677 = vmand %vm669, %vm661
      %vm678 = vmand %vm670, %vm662
      %v679 = vadd.s32 %v605, 16
      %v680 = vadd.s32 %v612, 16
      %v681 = vadd.s32 %v619, 16
      %v682 = vadd.s32 %v626, 16
      %v683 = vadd.s32 %v633, 16
      %v684 = vadd.s32 %v640, 16
      %v685 = vadd.s32 %v647, 16
      %v686 = vadd.s32 %v654, 16
      %v687 = vsel %vm671, %v679, %v605
      %v688 = vsel %vm672, %v680, %v612
      %v689 = vsel %vm673, %v681, %v619
      %v690 = vsel %vm674, %v682, %v626
      %v691 = vsel %vm675, %v683, %v633
      %v692 = vsel %vm676, %v684, %v640
      %v693 = vsel %vm677, %v685, %v647
      %v694 = vsel %vm678, %v686, %v654
      %vm695 = vcmp.gt.s32.totalorder %v687, 0
      %vm696 = vcmp.gt.s32.totalorder %v688, 0
      %vm697 = vcmp.gt.s32.totalorder %v689, 0
      %vm698 = vcmp.gt.s32.totalorder %v690, 0
      %vm699 = vcmp.gt.s32.totalorder %v691, 0
      %vm700 = vcmp.gt.s32.totalorder %v692, 0
      %vm701 = vcmp.gt.s32.totalorder %v693, 0
      %vm702 = vcmp.gt.s32.totalorder %v694, 0
      %v703 = vsel %vm695, 1, 0
      %v704 = vsel %vm696, 1, 0
      %v705 = vsel %vm697, 1, 0
      %v706 = vsel %vm698, 1, 0
      %v707 = vsel %vm699, 1, 0
      %v708 = vsel %vm700, 1, 0
      %v709 = vsel %vm701, 1, 0
      %v710 = vsel %vm702, 1, 0
      %v711 = vcvt.s32.f32 %v703
      %v712 = vcvt.s32.f32 %v704
      %v713 = vcvt.s32.f32 %v705
      %v714 = vcvt.s32.f32 %v706
      %v715 = vcvt.s32.f32 %v707
      %v716 = vcvt.s32.f32 %v708
      %v717 = vcvt.s32.f32 %v709
      %v718 = vcvt.s32.f32 %v710
      %vm719 = vcmp.lt.s32.totalorder %v687, 15
      %vm720 = vcmp.lt.s32.totalorder %v688, 15
      %vm721 = vcmp.lt.s32.totalorder %v689, 15
      %vm722 = vcmp.lt.s32.totalorder %v690, 15
      %vm723 = vcmp.lt.s32.totalorder %v691, 15
      %vm724 = vcmp.lt.s32.totalorder %v692, 15
      %vm725 = vcmp.lt.s32.totalorder %v693, 15
      %vm726 = vcmp.lt.s32.totalorder %v694, 15
      %v727 = vsel %vm719, 1, 0
      %v728 = vsel %vm720, 1, 0
      %v729 = vsel %vm721, 1, 0
      %v730 = vsel %vm722, 1, 0
      %v731 = vsel %vm723, 1, 0
      %v732 = vsel %vm724, 1, 0
      %v733 = vsel %vm725, 1, 0
      %v734 = vsel %vm726, 1, 0
      %v735 = vcvt.s32.f32 %v727
      %v736 = vcvt.s32.f32 %v728
      %v737 = vcvt.s32.f32 %v729
      %v738 = vcvt.s32.f32 %v730
      %v739 = vcvt.s32.f32 %v731
      %v740 = vcvt.s32.f32 %v732
      %v741 = vcvt.s32.f32 %v733
      %v742 = vcvt.s32.f32 %v734
      %v743 = vadd.f32 %v544, 0.0
      %v744 = vadd.f32 %v547, 0.0
      %v745 = vadd.f32 %v552, 0.0
      %v746 = vadd.f32 %v555, 0.0
      %v747 = vadd.f32 %v560, 0.0
      %v748 = vadd.f32 %v563, 0.0
      %v749 = vadd.f32 %v568, 0.0
      %v750 = vadd.f32 %v571, 0.0
      %v751 = vrot.slane %v544, 7
      %v752 = vrot.slane %v547, 7
      %v753 = vrot.slane %v552, 7
      %v754 = vrot.slane %v555, 7
      %v755 = vrot.slane %v560, 7
      %v756 = vrot.slane %v563, 7
      %v757 = vrot.slane %v568, 7
      %v758 = vrot.slane %v571, 7
      %vm759 = vcmp.lt.s32.totalorder %v591, 1
      %v760 = vsel %vm759, %v757, %v758
      %v761 = vsel %vm759, %v756, %v757
      %v762 = vsel %vm759, %v755, %v756
      %v763 = vsel %vm759, %v754, %v755
      %v764 = vsel %vm759, %v753, %v754
      %v765 = vsel %vm759, %v752, %v753
      %v766 = vsel %vm759, %v751, %v752
      %v767 = vsel %vm759, %v758, %v751
      %v768 = vmul.f32 %v711, %v767
      %v769 = vmul.f32 %v712, %v766
      %v770 = vmul.f32 %v713, %v765
      %v771 = vmul.f32 %v714, %v764
      %v772 = vmul.f32 %v715, %v763
      %v773 = vmul.f32 %v716, %v762
      %v774 = vmul.f32 %v717, %v761
      %v775 = vmul.f32 %v718, %v760
      %784 = vrot.lane.b32.xlu0 %v768, 8
      %v785 = vpop.permute.xlu0 %784
      %786 = vrot.lane.b32.xlu0 %v769, 8
      %v787 = vpop.permute.xlu0 %786
      %788 = vrot.lane.b32.xlu0 %v770, 8
      %v789 = vpop.permute.xlu0 %788
      %790 = vrot.lane.b32.xlu0 %v771, 8
      %v791 = vpop.permute.xlu0 %790
      %792 = vrot.lane.b32.xlu0 %v772, 8
      %v793 = vpop.permute.xlu0 %792
      %794 = vrot.lane.b32.xlu0 %v773, 8
      %v795 = vpop.permute.xlu0 %794
      %796 = vrot.lane.b32.xlu0 %v774, 8
      %v797 = vpop.permute.xlu0 %796
      %798 = vrot.lane.b32.xlu0 %v775, 8
      %v799 = vpop.permute.xlu0 %798
      %v808 = vadd.f32 %v743, %v785
      %v809 = vadd.f32 %v744, %v787
      %v810 = vadd.f32 %v745, %v789
      %v811 = vadd.f32 %v746, %v791
      %v812 = vadd.f32 %v747, %v793
      %v813 = vadd.f32 %v748, %v795
      %v814 = vadd.f32 %v749, %v797
      %v815 = vadd.f32 %v750, %v799
      %824 = vrot.lane.b32.xlu0 %v544, 112
      %v825 = vpop.permute.xlu0 %824
      %826 = vrot.lane.b32.xlu0 %v547, 112
      %v827 = vpop.permute.xlu0 %826
      %828 = vrot.lane.b32.xlu0 %v552, 112
      %v829 = vpop.permute.xlu0 %828
      %830 = vrot.lane.b32.xlu0 %v555, 112
      %v831 = vpop.permute.xlu0 %830
      %832 = vrot.lane.b32.xlu0 %v560, 112
      %v833 = vpop.permute.xlu0 %832
      %834 = vrot.lane.b32.xlu0 %v563, 112
      %v835 = vpop.permute.xlu0 %834
      %836 = vrot.lane.b32.xlu0 %v568, 112
      %v837 = vpop.permute.xlu0 %836
      %838 = vrot.lane.b32.xlu0 %v571, 112
      %v839 = vpop.permute.xlu0 %838
      %v848 = vrot.slane %v825, 1
      %v849 = vrot.slane %v827, 1
      %v850 = vrot.slane %v829, 1
      %v851 = vrot.slane %v831, 1
      %v852 = vrot.slane %v833, 1
      %v853 = vrot.slane %v835, 1
      %v854 = vrot.slane %v837, 1
      %v855 = vrot.slane %v839, 1
      %vm856 = vcmp.lt.s32.totalorder %v591, 7
      %v857 = vsel %vm856, %v854, %v855
      %v858 = vsel %vm856, %v853, %v854
      %v859 = vsel %vm856, %v852, %v853
      %v860 = vsel %vm856, %v851, %v852
      %v861 = vsel %vm856, %v850, %v851
      %v862 = vsel %vm856, %v849, %v850
      %v863 = vsel %vm856, %v848, %v849
      %v864 = vsel %vm856, %v855, %v848
      %v865 = vmul.f32 %v735, %v863
      %v866 = vmul.f32 %v736, %v862
      %v867 = vmul.f32 %v737, %v861
      %v868 = vmul.f32 %v738, %v860
      %v869 = vmul.f32 %v739, %v859
      %v870 = vmul.f32 %v740, %v858
      %v871 = vmul.f32 %v741, %v857
      %v872 = vmul.f32 %v742, %v864
      %881 = vrot.lane.b32.xlu0 %v865, 8
      %v882 = vpop.permute.xlu0 %881
      %883 = vrot.lane.b32.xlu0 %v866, 8
      %v884 = vpop.permute.xlu0 %883
      %885 = vrot.lane.b32.xlu0 %v867, 8
      %v886 = vpop.permute.xlu0 %885
      %887 = vrot.lane.b32.xlu0 %v868, 8
      %v888 = vpop.permute.xlu0 %887
      %889 = vrot.lane.b32.xlu0 %v869, 8
      %v890 = vpop.permute.xlu0 %889
      %891 = vrot.lane.b32.xlu0 %v870, 8
      %v892 = vpop.permute.xlu0 %891
      %893 = vrot.lane.b32.xlu0 %v871, 8
      %v894 = vpop.permute.xlu0 %893
      %895 = vrot.lane.b32.xlu0 %v872, 8
      %v896 = vpop.permute.xlu0 %895
      %v905 = vadd.f32 %v808, %v882
      %v906 = vadd.f32 %v809, %v884
      %v907 = vadd.f32 %v810, %v886
      %v908 = vadd.f32 %v811, %v888
      %v909 = vadd.f32 %v812, %v890
      %v910 = vadd.f32 %v813, %v892
      %v911 = vadd.f32 %v814, %v894
      %v912 = vadd.f32 %v815, %v896
      %915 = vrot.lane.b32.xlu0 %v552, 104
      %v916 = vpop.permute.xlu0 %915
      %917 = vrot.lane.b32.xlu0 %v555, 104
      %v918 = vpop.permute.xlu0 %917
      %919 = vrot.lane.b32.xlu0 %v560, 104
      %v920 = vpop.permute.xlu0 %919
      %921 = vrot.lane.b32.xlu0 %v563, 104
      %v922 = vpop.permute.xlu0 %921
      %923 = vrot.lane.b32.xlu0 %v568, 104
      %v924 = vpop.permute.xlu0 %923
      %925 = vrot.lane.b32.xlu0 %v571, 104
      %v926 = vpop.permute.xlu0 %925
      %927 = vrot.lane.b32.xlu0 %v576, 104
      %v928 = vpop.permute.xlu0 %927
      %929 = vrot.lane.b32.xlu0 %v579, 104
      %v930 = vpop.permute.xlu0 %929
      %v939 = vadd.f32 %v905, %v916
      %v940 = vadd.f32 %v906, %v918
      %v941 = vadd.f32 %v907, %v920
      %v942 = vadd.f32 %v908, %v922
      %v943 = vadd.f32 %v909, %v924
      %v944 = vadd.f32 %v910, %v926
      %v945 = vadd.f32 %v911, %v928
      %v946 = vadd.f32 %v912, %v930
      %v947 = vrot.slane %v916, 7
      %v948 = vrot.slane %v918, 7
      %v949 = vrot.slane %v920, 7
      %v950 = vrot.slane %v922, 7
      %v951 = vrot.slane %v924, 7
      %v952 = vrot.slane %v926, 7
      %v953 = vrot.slane %v928, 7
      %v954 = vrot.slane %v930, 7
      %v955 = vsel %vm759, %v953, %v954
      %v956 = vsel %vm759, %v952, %v953
      %v957 = vsel %vm759, %v951, %v952
      %v958 = vsel %vm759, %v950, %v951
      %v959 = vsel %vm759, %v949, %v950
      %v960 = vsel %vm759, %v948, %v949
      %v961 = vsel %vm759, %v947, %v948
      %v962 = vsel %vm759, %v954, %v947
      %v963 = vmul.f32 %v711, %v962
      %v964 = vmul.f32 %v712, %v961
      %v965 = vmul.f32 %v713, %v960
      %v966 = vmul.f32 %v714, %v959
      %v967 = vmul.f32 %v715, %v958
      %v968 = vmul.f32 %v716, %v957
      %v969 = vmul.f32 %v717, %v956
      %v970 = vmul.f32 %v718, %v955
      %979 = vrot.lane.b32.xlu0 %v963, 8
      %v980 = vpop.permute.xlu0 %979
      %981 = vrot.lane.b32.xlu0 %v964, 8
      %v982 = vpop.permute.xlu0 %981
      %983 = vrot.lane.b32.xlu0 %v965, 8
      %v984 = vpop.permute.xlu0 %983
      %985 = vrot.lane.b32.xlu0 %v966, 8
      %v986 = vpop.permute.xlu0 %985
      %987 = vrot.lane.b32.xlu0 %v967, 8
      %v988 = vpop.permute.xlu0 %987
      %989 = vrot.lane.b32.xlu0 %v968, 8
      %v990 = vpop.permute.xlu0 %989
      %991 = vrot.lane.b32.xlu0 %v969, 8
      %v992 = vpop.permute.xlu0 %991
      %993 = vrot.lane.b32.xlu0 %v970, 8
      %v994 = vpop.permute.xlu0 %993
      %v1003 = vadd.f32 %v939, %v980
      %v1004 = vadd.f32 %v940, %v982
      %v1005 = vadd.f32 %v941, %v984
      %v1006 = vadd.f32 %v942, %v986
      %v1007 = vadd.f32 %v943, %v988
      %v1008 = vadd.f32 %v944, %v990
      %v1009 = vadd.f32 %v945, %v992
      %v1010 = vadd.f32 %v946, %v994
      %1011 = vrot.lane.b32.xlu0 %v552, 88
      %v1012 = vpop.permute.xlu0 %1011
      %1013 = vrot.lane.b32.xlu0 %v555, 88
      %v1014 = vpop.permute.xlu0 %1013
      %1015 = vrot.lane.b32.xlu0 %v560, 88
      %v1016 = vpop.permute.xlu0 %1015
      %1017 = vrot.lane.b32.xlu0 %v563, 88
      %v1018 = vpop.permute.xlu0 %1017
      %1019 = vrot.lane.b32.xlu0 %v568, 88
      %v1020 = vpop.permute.xlu0 %1019
      %1021 = vrot.lane.b32.xlu0 %v571, 88
      %v1022 = vpop.permute.xlu0 %1021
      %1023 = vrot.lane.b32.xlu0 %v576, 88
      %v1024 = vpop.permute.xlu0 %1023
      %1025 = vrot.lane.b32.xlu0 %v579, 88
      %v1026 = vpop.permute.xlu0 %1025
      %v1035 = vrot.slane %v1012, 1
      %v1036 = vrot.slane %v1014, 1
      %v1037 = vrot.slane %v1016, 1
      %v1038 = vrot.slane %v1018, 1
      %v1039 = vrot.slane %v1020, 1
      %v1040 = vrot.slane %v1022, 1
      %v1041 = vrot.slane %v1024, 1
      %v1042 = vrot.slane %v1026, 1
      %v1043 = vsel %vm856, %v1041, %v1042
      %v1044 = vsel %vm856, %v1040, %v1041
      %v1045 = vsel %vm856, %v1039, %v1040
      %v1046 = vsel %vm856, %v1038, %v1039
      %v1047 = vsel %vm856, %v1037, %v1038
      %v1048 = vsel %vm856, %v1036, %v1037
      %v1049 = vsel %vm856, %v1035, %v1036
      %v1050 = vsel %vm856, %v1042, %v1035
      %v1051 = vmul.f32 %v735, %v1049
      %v1052 = vmul.f32 %v736, %v1048
      %v1053 = vmul.f32 %v737, %v1047
      %v1054 = vmul.f32 %v738, %v1046
      %v1055 = vmul.f32 %v739, %v1045
      %v1056 = vmul.f32 %v740, %v1044
      %v1057 = vmul.f32 %v741, %v1043
      %v1058 = vmul.f32 %v742, %v1050
      %1067 = vrot.lane.b32.xlu0 %v1051, 8
      %v1068 = vpop.permute.xlu0 %1067
      %1069 = vrot.lane.b32.xlu0 %v1052, 8
      %v1070 = vpop.permute.xlu0 %1069
      %1071 = vrot.lane.b32.xlu0 %v1053, 8
      %v1072 = vpop.permute.xlu0 %1071
      %1073 = vrot.lane.b32.xlu0 %v1054, 8
      %v1074 = vpop.permute.xlu0 %1073
      %1075 = vrot.lane.b32.xlu0 %v1055, 8
      %v1076 = vpop.permute.xlu0 %1075
      %1077 = vrot.lane.b32.xlu0 %v1056, 8
      %v1078 = vpop.permute.xlu0 %1077
      %1079 = vrot.lane.b32.xlu0 %v1057, 8
      %v1080 = vpop.permute.xlu0 %1079
      %1081 = vrot.lane.b32.xlu0 %v1058, 8
      %v1082 = vpop.permute.xlu0 %1081
      %v1091 = vadd.f32 %v1003, %v1068
      %v1092 = vadd.f32 %v1004, %v1070
      %v1093 = vadd.f32 %v1005, %v1072
      %v1094 = vadd.f32 %v1006, %v1074
      %v1095 = vadd.f32 %v1007, %v1076
      %v1096 = vadd.f32 %v1008, %v1078
      %v1097 = vadd.f32 %v1009, %v1080
      %v1098 = vadd.f32 %v1010, %v1082
      %1101 = vrot.lane.b32.xlu0 %v560, 80
      %v1102 = vpop.permute.xlu0 %1101
      %1103 = vrot.lane.b32.xlu0 %v563, 80
      %v1104 = vpop.permute.xlu0 %1103
      %1105 = vrot.lane.b32.xlu0 %v568, 80
      %v1106 = vpop.permute.xlu0 %1105
      %1107 = vrot.lane.b32.xlu0 %v571, 80
      %v1108 = vpop.permute.xlu0 %1107
      %1109 = vrot.lane.b32.xlu0 %v576, 80
      %v1110 = vpop.permute.xlu0 %1109
      %1111 = vrot.lane.b32.xlu0 %v579, 80
      %v1112 = vpop.permute.xlu0 %1111
      %1113 = vrot.lane.b32.xlu0 %v584, 80
      %v1114 = vpop.permute.xlu0 %1113
      %1115 = vrot.lane.b32.xlu0 %v587, 80
      %v1116 = vpop.permute.xlu0 %1115
      %v1125 = vadd.f32 %v1091, %v1102
      %v1126 = vadd.f32 %v1092, %v1104
      %v1127 = vadd.f32 %v1093, %v1106
      %v1128 = vadd.f32 %v1094, %v1108
      %v1129 = vadd.f32 %v1095, %v1110
      %v1130 = vadd.f32 %v1096, %v1112
      %v1131 = vadd.f32 %v1097, %v1114
      %v1132 = vadd.f32 %v1098, %v1116
      %v1133 = vrot.slane %v1102, 7
      %v1134 = vrot.slane %v1104, 7
      %v1135 = vrot.slane %v1106, 7
      %v1136 = vrot.slane %v1108, 7
      %v1137 = vrot.slane %v1110, 7
      %v1138 = vrot.slane %v1112, 7
      %v1139 = vrot.slane %v1114, 7
      %v1140 = vrot.slane %v1116, 7
      %v1141 = vsel %vm759, %v1139, %v1140
      %v1142 = vsel %vm759, %v1138, %v1139
      %v1143 = vsel %vm759, %v1137, %v1138
      %v1144 = vsel %vm759, %v1136, %v1137
      %v1145 = vsel %vm759, %v1135, %v1136
      %v1146 = vsel %vm759, %v1134, %v1135
      %v1147 = vsel %vm759, %v1133, %v1134
      %v1148 = vsel %vm759, %v1140, %v1133
      %v1149 = vmul.f32 %v711, %v1148
      %v1150 = vmul.f32 %v712, %v1147
      %v1151 = vmul.f32 %v713, %v1146
      %v1152 = vmul.f32 %v714, %v1145
      %v1153 = vmul.f32 %v715, %v1144
      %v1154 = vmul.f32 %v716, %v1143
      %v1155 = vmul.f32 %v717, %v1142
      %v1156 = vmul.f32 %v718, %v1141
      %1165 = vrot.lane.b32.xlu0 %v1149, 8
      %v1166 = vpop.permute.xlu0 %1165
      %1167 = vrot.lane.b32.xlu0 %v1150, 8
      %v1168 = vpop.permute.xlu0 %1167
      %1169 = vrot.lane.b32.xlu0 %v1151, 8
      %v1170 = vpop.permute.xlu0 %1169
      %1171 = vrot.lane.b32.xlu0 %v1152, 8
      %v1172 = vpop.permute.xlu0 %1171
      %1173 = vrot.lane.b32.xlu0 %v1153, 8
      %v1174 = vpop.permute.xlu0 %1173
      %1175 = vrot.lane.b32.xlu0 %v1154, 8
      %v1176 = vpop.permute.xlu0 %1175
      %1177 = vrot.lane.b32.xlu0 %v1155, 8
      %v1178 = vpop.permute.xlu0 %1177
      %1179 = vrot.lane.b32.xlu0 %v1156, 8
      %v1180 = vpop.permute.xlu0 %1179
      %v1189 = vadd.f32 %v1125, %v1166
      %v1190 = vadd.f32 %v1126, %v1168
      %v1191 = vadd.f32 %v1127, %v1170
      %v1192 = vadd.f32 %v1128, %v1172
      %v1193 = vadd.f32 %v1129, %v1174
      %v1194 = vadd.f32 %v1130, %v1176
      %v1195 = vadd.f32 %v1131, %v1178
      %v1196 = vadd.f32 %v1132, %v1180
      %1197 = vrot.lane.b32.xlu0 %v560, 64
      %v1198 = vpop.permute.xlu0 %1197
      %1199 = vrot.lane.b32.xlu0 %v563, 64
      %v1200 = vpop.permute.xlu0 %1199
      %1201 = vrot.lane.b32.xlu0 %v568, 64
      %v1202 = vpop.permute.xlu0 %1201
      %1203 = vrot.lane.b32.xlu0 %v571, 64
      %v1204 = vpop.permute.xlu0 %1203
      %1205 = vrot.lane.b32.xlu0 %v576, 64
      %v1206 = vpop.permute.xlu0 %1205
      %1207 = vrot.lane.b32.xlu0 %v579, 64
      %v1208 = vpop.permute.xlu0 %1207
      %1209 = vrot.lane.b32.xlu0 %v584, 64
      %v1210 = vpop.permute.xlu0 %1209
      %1211 = vrot.lane.b32.xlu0 %v587, 64
      %v1212 = vpop.permute.xlu0 %1211
      %v1221 = vrot.slane %v1198, 1
      %v1222 = vrot.slane %v1200, 1
      %v1223 = vrot.slane %v1202, 1
      %v1224 = vrot.slane %v1204, 1
      %v1225 = vrot.slane %v1206, 1
      %v1226 = vrot.slane %v1208, 1
      %v1227 = vrot.slane %v1210, 1
      %v1228 = vrot.slane %v1212, 1
      %v1229 = vsel %vm856, %v1227, %v1228
      %v1230 = vsel %vm856, %v1226, %v1227
      %v1231 = vsel %vm856, %v1225, %v1226
      %v1232 = vsel %vm856, %v1224, %v1225
      %v1233 = vsel %vm856, %v1223, %v1224
      %v1234 = vsel %vm856, %v1222, %v1223
      %v1235 = vsel %vm856, %v1221, %v1222
      %v1236 = vsel %vm856, %v1228, %v1221
      %v1237 = vmul.f32 %v735, %v1235
      %v1238 = vmul.f32 %v736, %v1234
      %v1239 = vmul.f32 %v737, %v1233
      %v1240 = vmul.f32 %v738, %v1232
      %v1241 = vmul.f32 %v739, %v1231
      %v1242 = vmul.f32 %v740, %v1230
      %v1243 = vmul.f32 %v741, %v1229
      %v1244 = vmul.f32 %v742, %v1236
      %1253 = vrot.lane.b32.xlu0 %v1237, 8
      %v1254 = vpop.permute.xlu0 %1253
      %1255 = vrot.lane.b32.xlu0 %v1238, 8
      %v1256 = vpop.permute.xlu0 %1255
      %1257 = vrot.lane.b32.xlu0 %v1239, 8
      %v1258 = vpop.permute.xlu0 %1257
      %1259 = vrot.lane.b32.xlu0 %v1240, 8
      %v1260 = vpop.permute.xlu0 %1259
      %1261 = vrot.lane.b32.xlu0 %v1241, 8
      %v1262 = vpop.permute.xlu0 %1261
      %1263 = vrot.lane.b32.xlu0 %v1242, 8
      %v1264 = vpop.permute.xlu0 %1263
      %1265 = vrot.lane.b32.xlu0 %v1243, 8
      %v1266 = vpop.permute.xlu0 %1265
      %1267 = vrot.lane.b32.xlu0 %v1244, 8
      %v1268 = vpop.permute.xlu0 %1267
      %v1277 = vadd.f32 %v1189, %v1254
      %v1278 = vadd.f32 %v1190, %v1256
      %v1279 = vadd.f32 %v1191, %v1258
      %v1280 = vadd.f32 %v1192, %v1260
      %v1281 = vadd.f32 %v1193, %v1262
      %v1282 = vadd.f32 %v1194, %v1264
      %v1283 = vadd.f32 %v1195, %v1266
      %v1284 = vadd.f32 %v1196, %v1268
      %1293 = vrot.lane.b32.xlu0 %v1277, 120
      %v1294 = vpop.permute.xlu0 %1293
      %1295 = vrot.lane.b32.xlu0 %v1278, 120
      %v1296 = vpop.permute.xlu0 %1295
      %1297 = vrot.lane.b32.xlu0 %v1279, 120
      %v1298 = vpop.permute.xlu0 %1297
      %1299 = vrot.lane.b32.xlu0 %v1280, 120
      %v1300 = vpop.permute.xlu0 %1299
      %1301 = vrot.lane.b32.xlu0 %v1281, 120
      %v1302 = vpop.permute.xlu0 %1301
      %1303 = vrot.lane.b32.xlu0 %v1282, 120
      %v1304 = vpop.permute.xlu0 %1303
      %1305 = vrot.lane.b32.xlu0 %v1283, 120
      %v1306 = vpop.permute.xlu0 %1305
      %1307 = vrot.lane.b32.xlu0 %v1284, 120
      %v1308 = vpop.permute.xlu0 %1307
      %vm1317 = vcmask 64512
      %1318 = vst.msk [vmem:[%s353] sm:$0xff] %vm1317, %v1294
      %1319 = vst.msk [vmem:[%s353 + $0x8] sm:$0xff] %vm1317, %v1296
      %1320 = vst.msk [vmem:[%s353 + $0x10] sm:$0xff] %vm1317, %v1298
      %1321 = vst.msk [vmem:[%s353 + $0x18] sm:$0xff] %vm1317, %v1300
      %1322 = vst.msk [vmem:[%s353 + $0x20] sm:$0xff] %vm1317, %v1302
      %1323 = vst.msk [vmem:[%s353 + $0x28] sm:$0xff] %vm1317, %v1304
      %1324 = vst.msk [vmem:[%s353 + $0x30] sm:$0xff] %vm1317, %v1306
      %1325 = vst.msk [vmem:[%s353 + $0x38] sm:$0xff] %vm1317, %v1308
      %s1326 = smul.u32 8, %s17
      %p1327 = scmp.lt.s32.totalorder %s1326, 63
      %s1328 = scalar_select %p1327, %s1326, 63
      %s1329 = smul.addr %s1328, 8
      %s1330 = scalar_lea.vmem %s6, %s1329
      // Predicated region
      $region45: #{dense_layer_forward.3} parent=43 // pred_check
        %p1331 = pneg %p192
      $region46: #{dense_layer_forward.3} parent=43 // pred_check_branch
        %1333 = sbr.rel (%p1331) target = $region48
      $region47: #{dense_layer_forward.3} parent=43 // pred_region
        %s1334 = smul.u32 8, %s17
      $region48: #{dense_layer_forward.3} parent=43 // pred_fallthru
        _
    $region44: #{dense_layer_forward.3} parent=5 // pred_fallthru
      _
    %p1335 = scmp.le.s32.totalorder 2, %s12
    // Predicated region
    $region49: #{dense_layer_forward.3} parent=5 // pred_check
      %p1336 = pneg %p1335
    $region50: #{dense_layer_forward.3} parent=5 // pred_check_branch
      %1338 = sbr.rel (%p1336) target = $region52
    $region51: #{dense_layer_forward.3} parent=5 // pred_region
      %s1339 = ssub.s32 %s12, 2
      // Predicated region
      $region53: #{dense_layer_forward.3} parent=51 // pred_check
        %p1340 = pneg %p198
      $region54: #{dense_layer_forward.3} parent=51 // pred_check_branch
        %1342 = sbr.rel (%p1340) target = $region56
      $region55: #{dense_layer_forward.3} parent=51 // pred_region
        %s1343 = smul.u32 8, %s18
        %p1344 = scmp.lt.s32.totalorder %s1343, 63
        %s1345 = scalar_select %p1344, %s1343, 63
        %s1346 = smul.addr %s1345, 8
        %s1347 = scalar_lea.vmem %s6, %s1346
      $region56: #{dense_layer_forward.3} parent=51 // pred_fallthru
        _
    $region52: #{dense_layer_forward.3} parent=5 // pred_fallthru
      _
  $region6: #{dense_layer_forward.3} parent=0 // loop_footer
    %s16 = sadd.s32 1, %s12
  $region7: #{dense_layer_forward.3} parent=0 // loop_footer_branch
    %11 = sbr.rel target = $region3
  $region8: #{dense_layer_forward.3} parent=0 // loop_exit
    _

</llo_original>
